<compile_context>
chip_gen: v6e
topology: v6e:2x2x1
jax: 0.10.0
libtpu: 0.0.40
codegen_flags: <defaults>
</compile_context>

<pallas_src>
import functools

import numpy as np
import jax
import jax.numpy as jnp
from jax import lax
from jax.experimental import pallas as pl
from jax.experimental.pallas import tpu as pltpu


# --------------------------------------------------------------------------- tunables

def _scoped_vmem_limit():
    # 32 MiB is safe on every chip (v7x only has 64 MiB physical VMEM); on
    # v5e/v6e (128 MiB physical) allow 64 MiB so larger row tiles stay resident.
    try:
        cap = pltpu.get_tpu_info().vmem_capacity_bytes
    except Exception:                      # conservative fallback
        cap = 64 * 1024 * 1024
    return 64 * 1024 * 1024 if cap >= 128 * 1024 * 1024 else 32 * 1024 * 1024


_VMEM_LIMIT = _scoped_vmem_limit()

_MESH_ROW_TILE = 256     # desired rows/tile for the mesh / grid projection MLPs
_EDGE_ROW_TILE = 512     # desired rows/tile for the message MLP + edge reduction
_GRID_TILE = 256         # desired grid cells per output tile of the segment mean


# --------------------------------------------------------------------------- helpers

def _round_up(x, m):
    return ((x + m - 1) // m) * m


def _pad_rows(a, multiple):
    pad = (-a.shape[0]) % multiple
    if pad:
        a = jnp.pad(a, ((0, pad), (0, 0)))
    return a


def _pad_cols(a, width):
    pad = width - a.shape[1]
    if pad > 0:
        a = jnp.pad(a, ((0, 0), (0, pad)))
    return a


def _pick_row_tile(n, desired):
    """Row tile: multiple of 128, <= desired, and >=2 grid steps when the
    input is big enough (v7x megacore sharding of the 'parallel' axis)."""
    n = max(int(n), 1)
    t = min(desired, _round_up(n, 128))
    while t > 128 and _round_up(n, t) // t < 2:
        t = _round_up(t // 2, 128)
    return t


def _gelu(x):
    # tanh-form GELU: the transcendental lands in the EUP slot instead of a
    # VALU-heavy erf polynomial.  Deviates from torch.nn.GELU (erf form) by
    # <= ~3e-4 absolute (review-sanctioned trade).
    c = float(np.sqrt(2.0 / np.pi))
    return 0.5 * x * (1.0 + jnp.tanh(c * (x + 0.044715 * x * x * x)))


def sincos_embed(coords, dim, max_wavelength=10000.0):
    """ContinuousSincosEmbed(dim, ndim) — plain JAX glue (cheap elementwise)."""
    n, ndim = coords.shape
    ndim_padding = dim % ndim
    dim_per_ndim = (dim - ndim_padding) // ndim
    sincos_padding = dim_per_ndim % 2
    padding = ndim_padding + sincos_padding * ndim
    eff = (dim - padding) // ndim
    assert eff > 0
    omega = 1.0 / (max_wavelength ** (jnp.arange(0, eff, 2, dtype=jnp.float32) / eff))
    out = coords[..., None].astype(jnp.float32) * omega[None, None, :]   # (n, ndim, eff//2)
    emb = jnp.concatenate([jnp.sin(out), jnp.cos(out)], axis=-1)          # (n, ndim, eff)
    emb = emb.reshape(n, ndim * eff)
    if padding > 0:
        emb = jnp.concatenate([emb, jnp.zeros((n, padding), emb.dtype)], axis=-1)
    return emb


# --------------------------------------------------------------------------- fused linear stacks

def _make_stack_kernel(num_layers, gelu_after, add_after, input_gelu):
    """Kernel: [optional GELU] -> (Linear [+add] [GELU]) * num_layers."""
    def kernel(*refs):
        pos = 0
        x_ref = refs[pos]; pos += 1
        add_ref = None
        if add_after is not None:
            add_ref = refs[pos]; pos += 1
        h = x_ref[...].astype(jnp.float32)
        if input_gelu:
            h = _gelu(h)
        for li in range(num_layers):
            w_ref = refs[pos]; b_ref = refs[pos + 1]; pos += 2
            h = jnp.dot(h.astype(jnp.bfloat16), w_ref[...],
                        preferred_element_type=jnp.float32) + b_ref[...]
            if add_after == li:
                h = h + add_ref[...].astype(jnp.float32)
            if gelu_after[li]:
                h = _gelu(h)
        o_ref = refs[pos]
        o_ref[...] = h.astype(o_ref.dtype)
    return kernel


def fused_stack(x, layers, *, gelu_after, out_cols, out_dtype=jnp.float32,
                add=None, add_after=None, input_gelu=False,
                row_tile=_MESH_ROW_TILE):
    """Fused stack of Linear layers (optional GELUs / mid-stack residual add).

    * weights are zero-padded to lane-dense (multiple-of-128) widths and cast
      to bf16 (MXU-native rate); accumulation stays f32.
    * rows are tiled on a "parallel" grid axis; weights/biases use constant
      index maps with a single VMEM buffer (pl.Buffered(1)).
    * the output keeps its padded rows (callers gather / mask only real rows).
    """
    n, d_in = x.shape
    num_layers = len(layers)
    assert len(gelu_after) == num_layers
    assert out_cols % 128 == 0 and out_cols >= layers[-1][0].shape[1]

    # padded per-layer output widths (lane-dense intermediates; gelu(0)=0 keeps
    # padded hidden units exactly zero through the stack)
    tgts = [out_cols if li == num_layers - 1 else _round_up(w.shape[1], 128)
            for li, (w, _) in enumerate(layers)]
    if add is not None:
        assert add_after is not None and add.shape[1] == tgts[add_after]

    cur = d_in
    pw, pb = [], []
    for (w, b), tgt in zip(layers, tgts):
        di, do = w.shape
        assert di <= cur and do <= tgt and b.shape[0] <= tgt
        wp = jnp.zeros((cur, tgt), jnp.float32).at[:di, :do].set(w.astype(jnp.float32))
        bp = jnp.zeros((tgt,), jnp.float32).at[:b.shape[0]].set(b.astype(jnp.float32))
        pw.append(wp.astype(jnp.bfloat16))       # bf16 weights: MXU-native, half VMEM/DMA
        pb.append(bp.reshape(1, tgt))            # biases stay f32 (added to f32 acc)
        cur = tgt

    xp = _pad_rows(x, row_tile)
    n_pad = xp.shape[0]
    add_p = None if add is None else _pad_rows(add, row_tile)

    kernel_fn = _make_stack_kernel(num_layers, tuple(bool(g) for g in gelu_after),
                                   add_after, input_gelu)

    def _run(weight_mode):
        wkw = {} if weight_mode is None else {"pipeline_mode": weight_mode}
        in_specs = [pl.BlockSpec((row_tile, d_in), lambda i: (i, 0))]
        call_args = [xp]
        if add_p is not None:
            in_specs.append(pl.BlockSpec((row_tile, add_p.shape[1]), lambda i: (i, 0)))
            call_args.append(add_p)
        for wp, bp in zip(pw, pb):
            in_specs.append(pl.BlockSpec(wp.shape, lambda i: (0, 0), **wkw))
            in_specs.append(pl.BlockSpec(bp.shape, lambda i: (0, 0), **wkw))
            call_args.append(wp)
            call_args.append(bp)
        return pl.pallas_call(
            kernel_fn,
            out_shape=jax.ShapeDtypeStruct((n_pad, out_cols), out_dtype),
            grid=(n_pad // row_tile,),
            in_specs=in_specs,
            out_specs=pl.BlockSpec((row_tile, out_cols), lambda i: (i, 0)),
            compiler_params=pltpu.CompilerParams(
                dimension_semantics=("parallel",),
                vmem_limit_bytes=_VMEM_LIMIT),
        )(*call_args)

    try:
        # Grid-invariant weights: a single VMEM buffer suffices (no re-DMA).
        return _run(pl.Buffered(1))
    except Exception:
        # Fallback for jax versions without single-buffer pipeline_mode support.
        return _run(None)


# --------------------------------------------------------------------------- segment mean

def _segment_mean_kernel(sblk_ref, nblk_ref, ids_ref, msg_ref, o_ref, acc_ref, *,
                         count_col):
    i = pl.program_id(0)          # grid-cell tile
    k = pl.program_id(1)          # edge-block step inside this tile's CSR window

    @pl.when(k == 0)
    def _init():
        acc_ref[...] = jnp.zeros_like(acc_ref)

    # Only accumulate edge blocks inside this grid tile's sorted-CSR window.
    # Out-of-window steps are clamped to the same block by the index_map
    # (no re-DMA) and skipped here.
    @pl.when(k < nblk_ref[i])
    def _accumulate():
        tg = acc_ref.shape[0]
        ids = ids_ref[...]                                    # (1, TE) int32
        te = ids.shape[1]
        rows = i * tg + lax.broadcasted_iota(jnp.int32, (tg, te), 0)
        onehot = (rows == ids).astype(jnp.bfloat16)           # 0/1 exact in bf16
        # msg carries a constant 1.0 in lane `count_col`, so this single MXU
        # matmul accumulates both the per-cell sum and the per-cell edge count.
        acc_ref[...] += jnp.dot(onehot, msg_ref[...],
                                preferred_element_type=jnp.float32)

    @pl.when(k == pl.num_programs(1) - 1)
    def _finalize():
        acc = acc_ref[...]
        cnt = acc[:, count_col:count_col + 1]
        # empty cells produce 0 (matches the reference's max(count, 1)).
        o_ref[...] = acc / jnp.maximum(cnt, 1.0)


def build_csr_windows(grid_ids, num_segments, grid_tile, edge_tile):
    """Per-grid-tile windows of edge blocks (sorted-CSR contract).

    Runs on device (jnp.searchsorted); only the static grid extent kmax (max
    edge blocks per tile) is pulled to the host as a single scalar.
    TODO(synk): under jax.jit, pass a static kmax upper bound instead of the
    scalar device pull; grid_ids sortedness is assumed (segment_csr contract).
    """
    g_pad = _round_up(max(int(num_segments), 1), grid_tile)
    n_gtiles = g_pad // grid_tile
    gid = grid_ids.astype(jnp.int32)
    lo = jnp.arange(n_gtiles, dtype=jnp.int32) * grid_tile
    starts = jnp.searchsorted(gid, lo, side="left")
    ends = jnp.searchsorted(gid, lo + grid_tile, side="left")
    has = ends > starts
    first_blk = starts // edge_tile
    last_blk = jnp.maximum(ends - 1, 0) // edge_tile
    sblk = jnp.where(has, first_blk, 0).astype(jnp.int32)
    nblk = jnp.where(has, last_blk - first_blk + 1, 0).astype(jnp.int32)
    kmax = max(int(jax.device_get(jnp.max(nblk))), 1)
    return sblk, nblk, kmax


def segment_mean(messages, grid_ids, num_segments, *, sblk, nblk, kmax,
                 count_col, grid_tile, edge_tile):
    """Mean of edge messages per destination grid cell (segment_csr 'mean').

    The edge axis is a tiled 'arbitrary' reduction with a VMEM accumulator;
    sorted-CSR block windows (scalar prefetch) restrict each grid tile to the
    edge blocks that can actually contain its ids.  The per-cell count rides
    along in lane `count_col` of the messages (constant 1.0 per edge)."""
    e = int(grid_ids.shape[0])
    rows, width = messages.shape
    assert rows >= e and width % 128 == 0
    e_pad = _round_up(max(rows, 1), edge_tile)
    if e_pad != rows:
        messages = jnp.pad(messages, ((0, e_pad - rows), (0, 0)))
    ids = jnp.pad(grid_ids.astype(jnp.int32), (0, e_pad - e),
                  constant_values=-1).reshape(1, e_pad)

    g_pad = _round_up(num_segments, grid_tile)
    n_gtiles = g_pad // grid_tile

    def _win(i, k, sb, nb):
        # clamp k into [0, nblk[i]-1]: out-of-window steps reuse the same block
        return sb[i] + jnp.minimum(k, jnp.maximum(nb[i], 1) - 1)

    grid_spec = pltpu.PrefetchScalarGridSpec(
        num_scalar_prefetch=2,
        grid=(n_gtiles, kmax),
        in_specs=[
            pl.BlockSpec((1, edge_tile), lambda i, k, sb, nb: (0, _win(i, k, sb, nb))),
            pl.BlockSpec((edge_tile, width), lambda i, k, sb, nb: (_win(i, k, sb, nb), 0)),
        ],
        out_specs=pl.BlockSpec((grid_tile, width), lambda i, k, sb, nb: (i, 0)),
        scratch_shapes=[pltpu.VMEM((grid_tile, width), jnp.float32)],
    )

    out = pl.pallas_call(
        functools.partial(_segment_mean_kernel, count_col=count_col),
        out_shape=jax.ShapeDtypeStruct((g_pad, width), jnp.float32),
        grid_spec=grid_spec,
        compiler_params=pltpu.CompilerParams(
            dimension_semantics=("parallel", "arbitrary"),
            vmem_limit_bytes=_VMEM_LIMIT),
    )(sblk, nblk, ids, messages)
    return out[:num_segments]


# --------------------------------------------------------------------------- forward

def cfd_gino_mesh_to_grid(params, x, mesh_pos, grid_pos, mesh_to_grid_edges,
                          hidden_dim, resolution):
    num_grid_points = int(np.prod(resolution))
    assert x.ndim == 2 and mesh_pos.ndim == 2
    assert grid_pos.ndim == 2 and mesh_to_grid_edges.ndim == 2
    assert grid_pos.shape[0] % num_grid_points == 0

    num_mesh = int(x.shape[0])
    num_grid_total = int(grid_pos.shape[0])
    grid_idx = mesh_to_grid_edges[:, 0].astype(jnp.int32)
    mesh_idx = mesh_to_grid_edges[:, 1].astype(jnp.int32)
    num_edges = int(grid_idx.shape[0])

    h_pad = _round_up(hidden_dim, 128)
    d1 = 2 * hidden_dim
    d1_pad = _round_up(d1, 128)
    # message width: reserve one spare zero-padded lane for the edge-count trick
    msg_cols = h_pad if hidden_dim < h_pad else h_pad + 128

    edge_tile = min(_EDGE_ROW_TILE, _round_up(num_edges, 128))
    grid_tile = _pick_row_tile(num_grid_total, _GRID_TILE)

    # CSR block windows for the reduction (device-side searchsorted), built
    # before any heavy kernel is dispatched so the single kmax scalar pull does
    # not serialize the MLP pipeline.
    sblk, nblk, kmax = build_csr_windows(grid_idx, num_grid_total, grid_tile, edge_tile)

    pos_mesh = _pad_cols(sincos_embed(mesh_pos, hidden_dim), h_pad)
    pos_grid = _pad_cols(sincos_embed(grid_pos, hidden_dim), h_pad)

    (w1m, b1m), l2m, l3m = params["message"]
    w1_mesh = w1m[:hidden_dim]          # (hidden_dim, 2*hidden_dim)
    w1_grid = w1m[hidden_dim:]          # (hidden_dim, 2*hidden_dim)

    # Algebraic hoist of the message MLP's first (linear) layer:
    #   concat(x_mesh[m], pos_grid[g]) @ W1 + b1
    #     == (x_mesh @ W1[:h])[m] + (pos_grid @ W1[h:] + b1)[g]
    # so layer-1 runs once per mesh point / grid cell instead of once per edge
    # and the (E, 2*hidden) edge-feature tensor never touches HBM.

    # a_mesh = (input_proj(x) + pos_embed(mesh_pos)) @ W1_mesh   (one fused
    # kernel; x_mesh itself never hits HBM)
    ip1, ip2, ip3 = params["input_proj"]
    a_mesh = fused_stack(
        x, [ip1, ip2, ip3, (w1_mesh, jnp.zeros((d1,), jnp.float32))],
        gelu_after=(True, True, False, False),
        add=pos_mesh, add_after=2,
        out_cols=d1_pad, out_dtype=jnp.bfloat16,
        row_tile=_pick_row_tile(num_mesh, _MESH_ROW_TILE))

    # a_grid = pos_embed(grid_pos) @ W1_grid + b1
    a_grid = fused_stack(
        pos_grid, [(w1_grid, b1m)],
        gelu_after=(False,),
        out_cols=d1_pad, out_dtype=jnp.bfloat16,
        row_tile=_pick_row_tile(num_grid_total, _MESH_ROW_TILE))

    # Per-edge layer-1 pre-activation (gather + add, XLA glue, bf16 rows).
    # TODO(synk): fuse this gather into the message-tail kernel via
    # scalar-prefetched edge indices to drop the (E, d1_pad) HBM round trip.
    e_pad = _round_up(num_edges, edge_tile)
    mesh_idx_p = jnp.pad(mesh_idx, (0, e_pad - num_edges))
    grid_idx_p = jnp.pad(grid_idx, (0, e_pad - num_edges))
    pre1 = a_mesh[mesh_idx_p] + a_grid[grid_idx_p]            # (e_pad, d1_pad) bf16

    # message tail: GELU -> Linear -> GELU -> Linear; lane `hidden_dim` of the
    # (zero-padded) output carries a constant 1.0 used as the per-edge count.
    (w2m, b2m), (w3m, b3m) = l2m, l3m
    b3c = (jnp.zeros((msg_cols,), jnp.float32)
           .at[:hidden_dim].set(b3m.astype(jnp.float32))
           .at[hidden_dim].set(1.0))
    msg = fused_stack(
        pre1, [(w2m, b2m), (w3m, b3c)],
        gelu_after=(True, False), input_gelu=True,
        out_cols=msg_cols, out_dtype=jnp.bfloat16,
        row_tile=edge_tile)

    # segment-mean into grid cells (Pallas kernel; CSR-windowed tiled reduction)
    grid_feat = segment_mean(msg, grid_idx, num_grid_total,
                             sblk=sblk, nblk=nblk, kmax=kmax,
                             count_col=hidden_dim,
                             grid_tile=grid_tile, edge_tile=edge_tile)

    batch = num_grid_total // num_grid_points
    return grid_feat[:, :hidden_dim].reshape(batch, num_grid_points, hidden_dim)


# --------------------------------------------------------------------------- init / reference

def init_params(key, input_dim, hidden_dim):
    """xavier_uniform weights, zero biases (matches init_xavier_uniform_zero_bias)."""
    keys = jax.random.split(key, 6)

    def lin(k, din, dout):
        bound = float(np.sqrt(6.0 / (din + dout)))
        w = jax.random.uniform(k, (din, dout), jnp.float32, -bound, bound)
        return (w, jnp.zeros((dout,), jnp.float32))

    return {
        "input_proj": (lin(keys[0], input_dim, hidden_dim),
                       lin(keys[1], hidden_dim, hidden_dim),
                       lin(keys[2], hidden_dim, hidden_dim)),
        "message": (lin(keys[3], 2 * hidden_dim, 2 * hidden_dim),
                    lin(keys[4], 2 * hidden_dim, hidden_dim),
                    lin(keys[5], hidden_dim, hidden_dim)),
    }


def reference_forward(params, x, mesh_pos, grid_pos, edges, hidden_dim, resolution):
    """Plain-JAX f32 reference of the PyTorch forward (same GELU form)."""
    def mm(a, b):
        return jnp.dot(a, b, precision=lax.Precision.HIGHEST)

    def mlp(h, layers):
        (w1, b1), (w2, b2), (w3, b3) = layers
        h = _gelu(mm(h, w1) + b1)
        h = _gelu(mm(h, w2) + b2)
        return mm(h, w3) + b3

    pos_mesh = sincos_embed(mesh_pos, hidden_dim)
    pos_grid = sincos_embed(grid_pos, hidden_dim)
    xm = mlp(x, params["input_proj"]) + pos_mesh
    gi, mi = edges[:, 0], edges[:, 1]
    ef = jnp.concatenate([xm[mi], pos_grid[gi]], axis=1)
    msg = mlp(ef, params["message"])
    g = grid_pos.shape[0]
    sums = jax.ops.segment_sum(msg, gi, num_segments=g)
    counts = jax.ops.segment_sum(jnp.ones((msg.shape[0],), jnp.float32), gi, num_segments=g)
    mean = sums / jnp.maximum(counts, 1.0)[:, None]
    ngp = int(np.prod(resolution))
    return mean.reshape(g // ngp, ngp, hidden_dim)


# --------------------------------------------------------------------------- main

if __name__ == "__main__":
    input_dim, hidden_dim = 4, 32
    resolution = (8, 8)
    batch = 3
    num_mesh, num_edges = 40, 1000
    num_grid_points = int(np.prod(resolution))

    key = jax.random.PRNGKey(0)
    k_param, k_x, k_mpos, k_eg, k_em = jax.random.split(key, 5)

    params = init_params(k_param, input_dim, hidden_dim)

    x = jax.random.normal(k_x, (num_mesh, input_dim), jnp.float32)
    mesh_pos = jax.random.uniform(k_mpos, (num_mesh, 2), jnp.float32, 0.0, 10.0)

    # batch copies of a regular 8x8 grid of positions
    gy, gx = jnp.meshgrid(jnp.arange(float(resolution[0])),
                          jnp.arange(float(resolution[1])), indexing="ij")
    grid_pos_single = jnp.stack([gy.reshape(-1), gx.reshape(-1)], axis=1) * 1.25
    grid_pos = jnp.tile(grid_pos_single, (batch, 1))           # (192, 2)
    num_grid_total = grid_pos.shape[0]

    # edges (grid_idx, mesh_idx), sorted by grid_idx as segment_csr assumes
    grid_idx = jnp.sort(jax.random.randint(k_eg, (num_edges,), 0, num_grid_total))
    mesh_idx = jax.random.randint(k_em, (num_edges,), 0, num_mesh)
    mesh_to_grid_edges = jnp.stack([grid_idx, mesh_idx], axis=1).astype(jnp.int32)

    out = cfd_gino_mesh_to_grid(params, x, mesh_pos, grid_pos, mesh_to_grid_edges,
                                hidden_dim=hidden_dim, resolution=resolution)
    out = jax.block_until_ready(out)
    assert out.shape == (batch, num_grid_points, hidden_dim), out.shape
    assert bool(jnp.all(jnp.isfinite(out)))

    ref = reference_forward(params, x, mesh_pos, grid_pos, mesh_to_grid_edges,
                            hidden_dim, resolution)
    # bf16 matmul operands (f32 accumulation) -> compare at bf16-level tolerance
    np.testing.assert_allclose(np.asarray(out), np.asarray(ref), rtol=3e-2, atol=3e-2)

    print("KERNEL_OK")
</pallas_src>

<mosaic_0001>
module attributes {stable_mosaic.version = 11 : i64} {
  func.func @kernel(%arg0: i32, %arg1: memref<128x4xf32, #tpu.memory_space<vmem>>, %arg2: memref<128x128xf32, #tpu.memory_space<vmem>>, %arg3: memref<4x128xbf16, #tpu.memory_space<vmem>>, %arg4: memref<1x128xf32, #tpu.memory_space<vmem>>, %arg5: memref<128x128xbf16, #tpu.memory_space<vmem>>, %arg6: memref<1x128xf32, #tpu.memory_space<vmem>>, %arg7: memref<128x128xbf16, #tpu.memory_space<vmem>>, %arg8: memref<1x128xf32, #tpu.memory_space<vmem>>, %arg9: memref<128x128xbf16, #tpu.memory_space<vmem>>, %arg10: memref<1x128xf32, #tpu.memory_space<vmem>>, %arg11: memref<128x128xbf16, #tpu.memory_space<vmem>>) attributes {dimension_semantics = [#tpu.dimension_semantics<parallel>], iteration_bounds = array<i64: 1>, scalar_prefetch = 0 : i64, scratch_operands = 0 : i64, tpu.core_type = #tpu.core_type<tc>, window_params = [{transform_indices = @transform_0, window_bounds = array<i64: 128, 4>}, {transform_indices = @transform_1, window_bounds = array<i64: 128, 128>}, {pipeline_mode = #tpu.pipeline_mode<synchronous>, transform_indices = @transform_2, window_bounds = array<i64: 4, 128>}, {pipeline_mode = #tpu.pipeline_mode<synchronous>, transform_indices = @transform_3, window_bounds = array<i64: 1, 128>}, {pipeline_mode = #tpu.pipeline_mode<synchronous>, transform_indices = @transform_4, window_bounds = array<i64: 128, 128>}, {pipeline_mode = #tpu.pipeline_mode<synchronous>, transform_indices = @transform_5, window_bounds = array<i64: 1, 128>}, {pipeline_mode = #tpu.pipeline_mode<synchronous>, transform_indices = @transform_6, window_bounds = array<i64: 128, 128>}, {pipeline_mode = #tpu.pipeline_mode<synchronous>, transform_indices = @transform_7, window_bounds = array<i64: 1, 128>}, {pipeline_mode = #tpu.pipeline_mode<synchronous>, transform_indices = @transform_8, window_bounds = array<i64: 128, 128>}, {pipeline_mode = #tpu.pipeline_mode<synchronous>, transform_indices = @transform_9, window_bounds = array<i64: 1, 128>}, {transform_indices = @transform_10, window_bounds = array<i64: 128, 128>}]} {
    %c0 = arith.constant 0 : index
    %c0_0 = arith.constant 0 : index
    %0 = vector.load %arg1[%c0, %c0_0] : memref<128x4xf32, #tpu.memory_space<vmem>>, vector<128x4xf32>
    %1 = arith.truncf %0 : vector<128x4xf32> to vector<128x4xbf16>
    %c0_1 = arith.constant 0 : index
    %c0_2 = arith.constant 0 : index
    %2 = vector.load %arg3[%c0_1, %c0_2] : memref<4x128xbf16, #tpu.memory_space<vmem>>, vector<4x128xbf16>
    %cst = arith.constant dense<0.000000e+00> : vector<128x128xf32>
    %3 = tpu.matmul %1, %2, %cst {dimension_numbers = #tpu.dot_dimension_numbers<[1], [0], [0], [1], [0, 0, 1, 1], [], []>} : vector<128x4xbf16>, vector<4x128xbf16>, vector<128x128xf32> -> vector<128x128xf32>
    %c0_3 = arith.constant 0 : index
    %c0_4 = arith.constant 0 : index
    %4 = vector.load %arg4[%c0_3, %c0_4] : memref<1x128xf32, #tpu.memory_space<vmem>>, vector<1x128xf32>
    %5 = vector.broadcast %4 : vector<1x128xf32> to vector<128x128xf32>
    %6 = arith.addf %3, %5 : vector<128x128xf32>
    %cst_5 = arith.constant 5.000000e-01 : f32
    %7 = vector.broadcast %cst_5 : f32 to vector<128x128xf32>
    %8 = arith.mulf %7, %6 : vector<128x128xf32>
    %cst_6 = arith.constant 4.471500e-02 : f32
    %9 = vector.broadcast %cst_6 : f32 to vector<128x128xf32>
    %10 = arith.mulf %9, %6 : vector<128x128xf32>
    %11 = arith.mulf %10, %6 : vector<128x128xf32>
    %12 = arith.mulf %11, %6 : vector<128x128xf32>
    %13 = arith.addf %6, %12 : vector<128x128xf32>
    %cst_7 = arith.constant 0.797884583 : f32
    %14 = vector.broadcast %cst_7 : f32 to vector<128x128xf32>
    %15 = arith.mulf %14, %13 : vector<128x128xf32>
    %16 = math.tanh %15 : vector<128x128xf32>
    %cst_8 = arith.constant 1.000000e+00 : f32
    %17 = vector.broadcast %cst_8 : f32 to vector<128x128xf32>
    %18 = arith.addf %17, %16 : vector<128x128xf32>
    %19 = arith.mulf %8, %18 : vector<128x128xf32>
    %20 = arith.truncf %19 : vector<128x128xf32> to vector<128x128xbf16>
    %c0_9 = arith.constant 0 : index
    %c0_10 = arith.constant 0 : index
    %21 = vector.load %arg5[%c0_9, %c0_10] : memref<128x128xbf16, #tpu.memory_space<vmem>>, vector<128x128xbf16>
    %cst_11 = arith.constant dense<0.000000e+00> : vector<128x128xf32>
    %22 = tpu.matmul %20, %21, %cst_11 {dimension_numbers = #tpu.dot_dimension_numbers<[1], [0], [0], [1], [0, 0, 1, 1], [], []>} : vector<128x128xbf16>, vector<128x128xbf16>, vector<128x128xf32> -> vector<128x128xf32>
    %c0_12 = arith.constant 0 : index
    %c0_13 = arith.constant 0 : index
    %23 = vector.load %arg6[%c0_12, %c0_13] : memref<1x128xf32, #tpu.memory_space<vmem>>, vector<1x128xf32>
    %24 = vector.broadcast %23 : vector<1x128xf32> to vector<128x128xf32>
    %25 = arith.addf %22, %24 : vector<128x128xf32>
    %cst_14 = arith.constant 5.000000e-01 : f32
    %26 = vector.broadcast %cst_14 : f32 to vector<128x128xf32>
    %27 = arith.mulf %26, %25 : vector<128x128xf32>
    %cst_15 = arith.constant 4.471500e-02 : f32
    %28 = vector.broadcast %cst_15 : f32 to vector<128x128xf32>
    %29 = arith.mulf %28, %25 : vector<128x128xf32>
    %30 = arith.mulf %29, %25 : vector<128x128xf32>
    %31 = arith.mulf %30, %25 : vector<128x128xf32>
    %32 = arith.addf %25, %31 : vector<128x128xf32>
    %cst_16 = arith.constant 0.797884583 : f32
    %33 = vector.broadcast %cst_16 : f32 to vector<128x128xf32>
    %34 = arith.mulf %33, %32 : vector<128x128xf32>
    %35 = math.tanh %34 : vector<128x128xf32>
    %cst_17 = arith.constant 1.000000e+00 : f32
    %36 = vector.broadcast %cst_17 : f32 to vector<128x128xf32>
    %37 = arith.addf %36, %35 : vector<128x128xf32>
    %38 = arith.mulf %27, %37 : vector<128x128xf32>
    %39 = arith.truncf %38 : vector<128x128xf32> to vector<128x128xbf16>
    %c0_18 = arith.constant 0 : index
    %c0_19 = arith.constant 0 : index
    %40 = vector.load %arg7[%c0_18, %c0_19] : memref<128x128xbf16, #tpu.memory_space<vmem>>, vector<128x128xbf16>
    %cst_20 = arith.constant dense<0.000000e+00> : vector<128x128xf32>
    %41 = tpu.matmul %39, %40, %cst_20 {dimension_numbers = #tpu.dot_dimension_numbers<[1], [0], [0], [1], [0, 0, 1, 1], [], []>} : vector<128x128xbf16>, vector<128x128xbf16>, vector<128x128xf32> -> vector<128x128xf32>
    %c0_21 = arith.constant 0 : index
    %c0_22 = arith.constant 0 : index
    %42 = vector.load %arg8[%c0_21, %c0_22] : memref<1x128xf32, #tpu.memory_space<vmem>>, vector<1x128xf32>
    %43 = vector.broadcast %42 : vector<1x128xf32> to vector<128x128xf32>
    %44 = arith.addf %41, %43 : vector<128x128xf32>
    %c0_23 = arith.constant 0 : index
    %c0_24 = arith.constant 0 : index
    %45 = vector.load %arg2[%c0_23, %c0_24] : memref<128x128xf32, #tpu.memory_space<vmem>>, vector<128x128xf32>
    %46 = arith.addf %44, %45 : vector<128x128xf32>
    %47 = arith.truncf %46 : vector<128x128xf32> to vector<128x128xbf16>
    %c0_25 = arith.constant 0 : index
    %c0_26 = arith.constant 0 : index
    %48 = vector.load %arg9[%c0_25, %c0_26] : memref<128x128xbf16, #tpu.memory_space<vmem>>, vector<128x128xbf16>
    %cst_27 = arith.constant dense<0.000000e+00> : vector<128x128xf32>
    %49 = tpu.matmul %47, %48, %cst_27 {dimension_numbers = #tpu.dot_dimension_numbers<[1], [0], [0], [1], [0, 0, 1, 1], [], []>} : vector<128x128xbf16>, vector<128x128xbf16>, vector<128x128xf32> -> vector<128x128xf32>
    %c0_28 = arith.constant 0 : index
    %c0_29 = arith.constant 0 : index
    %50 = vector.load %arg10[%c0_28, %c0_29] : memref<1x128xf32, #tpu.memory_space<vmem>>, vector<1x128xf32>
    %51 = vector.broadcast %50 : vector<1x128xf32> to vector<128x128xf32>
    %52 = arith.addf %49, %51 : vector<128x128xf32>
    %53 = arith.truncf %52 : vector<128x128xf32> to vector<128x128xbf16>
    %c0_30 = arith.constant 0 : index
    %c0_31 = arith.constant 0 : index
    %54 = vector.load %arg11[%c0_30, %c0_31] : memref<128x128xbf16, #tpu.memory_space<vmem>>, vector<128x128xbf16>
    tpu.vector_store %arg11[%c0_30, %c0_31], %53 {strides = array<i32>} : memref<128x128xbf16, #tpu.memory_space<vmem>>, vector<128x128xbf16>,
    return
  }
  func.func @transform_0(%arg0: i32) -> (i32, i32) {
    %c0_i32 = arith.constant 0 : i32
    %c0_i32_0 = arith.constant 0 : i32
    return %arg0, %c0_i32 : i32, i32
  }
  func.func @transform_1(%arg0: i32) -> (i32, i32) {
    %c0_i32 = arith.constant 0 : i32
    %c0_i32_0 = arith.constant 0 : i32
    return %arg0, %c0_i32 : i32, i32
  }
  func.func @transform_2(%arg0: i32) -> (i32, i32) {
    %c0_i32 = arith.constant 0 : i32
    %c0_i32_0 = arith.constant 0 : i32
    %c0_i32_1 = arith.constant 0 : i32
    return %c0_i32, %c0_i32_0 : i32, i32
  }
  func.func @transform_3(%arg0: i32) -> (i32, i32) {
    %c0_i32 = arith.constant 0 : i32
    %c0_i32_0 = arith.constant 0 : i32
    %c0_i32_1 = arith.constant 0 : i32
    return %c0_i32, %c0_i32_0 : i32, i32
  }
  func.func @transform_4(%arg0: i32) -> (i32, i32) {
    %c0_i32 = arith.constant 0 : i32
    %c0_i32_0 = arith.constant 0 : i32
    %c0_i32_1 = arith.constant 0 : i32
    return %c0_i32, %c0_i32_0 : i32, i32
  }
  func.func @transform_5(%arg0: i32) -> (i32, i32) {
    %c0_i32 = arith.constant 0 : i32
    %c0_i32_0 = arith.constant 0 : i32
    %c0_i32_1 = arith.constant 0 : i32
    return %c0_i32, %c0_i32_0 : i32, i32
  }
  func.func @transform_6(%arg0: i32) -> (i32, i32) {
    %c0_i32 = arith.constant 0 : i32
    %c0_i32_0 = arith.constant 0 : i32
    %c0_i32_1 = arith.constant 0 : i32
    return %c0_i32, %c0_i32_0 : i32, i32
  }
  func.func @transform_7(%arg0: i32) -> (i32, i32) {
    %c0_i32 = arith.constant 0 : i32
    %c0_i32_0 = arith.constant 0 : i32
    %c0_i32_1 = arith.constant 0 : i32
    return %c0_i32, %c0_i32_0 : i32, i32
  }
  func.func @transform_8(%arg0: i32) -> (i32, i32) {
    %c0_i32 = arith.constant 0 : i32
    %c0_i32_0 = arith.constant 0 : i32
    %c0_i32_1 = arith.constant 0 : i32
    return %c0_i32, %c0_i32_0 : i32, i32
  }
  func.func @transform_9(%arg0: i32) -> (i32, i32) {
    %c0_i32 = arith.constant 0 : i32
    %c0_i32_0 = arith.constant 0 : i32
    %c0_i32_1 = arith.constant 0 : i32
    return %c0_i32, %c0_i32_0 : i32, i32
  }
  func.func @transform_10(%arg0: i32) -> (i32, i32) {
    %c0_i32 = arith.constant 0 : i32
    %c0_i32_0 = arith.constant 0 : i32
    return %arg0, %c0_i32 : i32, i32
  }
}

module attributes {stable_mosaic.version = 11 : i64} {
  func.func @kernel(%arg0: i32, %arg1: memref<128x4xf32, #tpu.memory_space<vmem>>, %arg2: memref<128x128xf32, #tpu.memory_space<vmem>>, %arg3: memref<4x128xbf16, #tpu.memory_space<vmem>>, %arg4: memref<1x128xf32, #tpu.memory_space<vmem>>, %arg5: memref<128x128xbf16, #tpu.memory_space<vmem>>, %arg6: memref<1x128xf32, #tpu.memory_space<vmem>>, %arg7: memref<128x128xbf16, #tpu.memory_space<vmem>>, %arg8: memref<1x128xf32, #tpu.memory_space<vmem>>, %arg9: memref<128x128xbf16, #tpu.memory_space<vmem>>, %arg10: memref<1x128xf32, #tpu.memory_space<vmem>>, %arg11: memref<128x128xbf16, #tpu.memory_space<vmem>>) attributes {dimension_semantics = [#tpu.dimension_semantics<parallel>], iteration_bounds = array<i64: 1>, scalar_prefetch = 0 : i64, scratch_operands = 0 : i64, tpu.core_type = #tpu.core_type<tc>, window_params = [{transform_indices = @transform_0, window_bounds = array<i64: 128, 4>}, {transform_indices = @transform_1, window_bounds = array<i64: 128, 128>}, {pipeline_mode = #tpu.pipeline_mode<synchronous>, transform_indices = @transform_2, window_bounds = array<i64: 4, 128>}, {pipeline_mode = #tpu.pipeline_mode<synchronous>, transform_indices = @transform_3, window_bounds = array<i64: 1, 128>}, {pipeline_mode = #tpu.pipeline_mode<synchronous>, transform_indices = @transform_4, window_bounds = array<i64: 128, 128>}, {pipeline_mode = #tpu.pipeline_mode<synchronous>, transform_indices = @transform_5, window_bounds = array<i64: 1, 128>}, {pipeline_mode = #tpu.pipeline_mode<synchronous>, transform_indices = @transform_6, window_bounds = array<i64: 128, 128>}, {pipeline_mode = #tpu.pipeline_mode<synchronous>, transform_indices = @transform_7, window_bounds = array<i64: 1, 128>}, {pipeline_mode = #tpu.pipeline_mode<synchronous>, transform_indices = @transform_8, window_bounds = array<i64: 128, 128>}, {pipeline_mode = #tpu.pipeline_mode<synchronous>, transform_indices = @transform_9, window_bounds = array<i64: 1, 128>}, {transform_indices = @transform_10, window_bounds = array<i64: 128, 128>}]} {
    %c0 = arith.constant 0 : index
    %c0_0 = arith.constant 0 : index
    %0 = vector.load %arg1[%c0, %c0_0] : memref<128x4xf32, #tpu.memory_space<vmem>>, vector<128x4xf32>
    %1 = arith.truncf %0 : vector<128x4xf32> to vector<128x4xbf16>
    %c0_1 = arith.constant 0 : index
    %c0_2 = arith.constant 0 : index
    %2 = vector.load %arg3[%c0_1, %c0_2] : memref<4x128xbf16, #tpu.memory_space<vmem>>, vector<4x128xbf16>
    %cst = arith.constant dense<0.000000e+00> : vector<128x128xf32>
    %3 = tpu.matmul %1, %2, %cst {dimension_numbers = #tpu.dot_dimension_numbers<[1], [0], [0], [1], [0, 0, 1, 1], [], []>} : vector<128x4xbf16>, vector<4x128xbf16>, vector<128x128xf32> -> vector<128x128xf32>
    %c0_3 = arith.constant 0 : index
    %c0_4 = arith.constant 0 : index
    %4 = vector.load %arg4[%c0_3, %c0_4] : memref<1x128xf32, #tpu.memory_space<vmem>>, vector<1x128xf32>
    %5 = vector.broadcast %4 : vector<1x128xf32> to vector<128x128xf32>
    %6 = arith.addf %3, %5 : vector<128x128xf32>
    %cst_5 = arith.constant 5.000000e-01 : f32
    %7 = vector.broadcast %cst_5 : f32 to vector<128x128xf32>
    %8 = arith.mulf %7, %6 : vector<128x128xf32>
    %cst_6 = arith.constant 4.471500e-02 : f32
    %9 = vector.broadcast %cst_6 : f32 to vector<128x128xf32>
    %10 = arith.mulf %9, %6 : vector<128x128xf32>
    %11 = arith.mulf %10, %6 : vector<128x128xf32>
    %12 = arith.mulf %11, %6 : vector<128x128xf32>
    %13 = arith.addf %6, %12 : vector<128x128xf32>
    %cst_7 = arith.constant 0.797884583 : f32
    %14 = vector.broadcast %cst_7 : f32 to vector<128x128xf32>
    %15 = arith.mulf %14, %13 : vector<128x128xf32>
    %16 = math.tanh %15 : vector<128x128xf32>
    %cst_8 = arith.constant 1.000000e+00 : f32
    %17 = vector.broadcast %cst_8 : f32 to vector<128x128xf32>
    %18 = arith.addf %17, %16 : vector<128x128xf32>
    %19 = arith.mulf %8, %18 : vector<128x128xf32>
    %20 = arith.truncf %19 : vector<128x128xf32> to vector<128x128xbf16>
    %c0_9 = arith.constant 0 : index
    %c0_10 = arith.constant 0 : index
    %21 = vector.load %arg5[%c0_9, %c0_10] : memref<128x128xbf16, #tpu.memory_space<vmem>>, vector<128x128xbf16>
    %cst_11 = arith.constant dense<0.000000e+00> : vector<128x128xf32>
    %22 = tpu.matmul %20, %21, %cst_11 {dimension_numbers = #tpu.dot_dimension_numbers<[1], [0], [0], [1], [0, 0, 1, 1], [], []>} : vector<128x128xbf16>, vector<128x128xbf16>, vector<128x128xf32> -> vector<128x128xf32>
    %c0_12 = arith.constant 0 : index
    %c0_13 = arith.constant 0 : index
    %23 = vector.load %arg6[%c0_12, %c0_13] : memref<1x128xf32, #tpu.memory_space<vmem>>, vector<1x128xf32>
    %24 = vector.broadcast %23 : vector<1x128xf32> to vector<128x128xf32>
    %25 = arith.addf %22, %24 : vector<128x128xf32>
    %cst_14 = arith.constant 5.000000e-01 : f32
    %26 = vector.broadcast %cst_14 : f32 to vector<128x128xf32>
    %27 = arith.mulf %26, %25 : vector<128x128xf32>
    %cst_15 = arith.constant 4.471500e-02 : f32
    %28 = vector.broadcast %cst_15 : f32 to vector<128x128xf32>
    %29 = arith.mulf %28, %25 : vector<128x128xf32>
    %30 = arith.mulf %29, %25 : vector<128x128xf32>
    %31 = arith.mulf %30, %25 : vector<128x128xf32>
    %32 = arith.addf %25, %31 : vector<128x128xf32>
    %cst_16 = arith.constant 0.797884583 : f32
    %33 = vector.broadcast %cst_16 : f32 to vector<128x128xf32>
    %34 = arith.mulf %33, %32 : vector<128x128xf32>
    %35 = math.tanh %34 : vector<128x128xf32>
    %cst_17 = arith.constant 1.000000e+00 : f32
    %36 = vector.broadcast %cst_17 : f32 to vector<128x128xf32>
    %37 = arith.addf %36, %35 : vector<128x128xf32>
    %38 = arith.mulf %27, %37 : vector<128x128xf32>
    %39 = arith.truncf %38 : vector<128x128xf32> to vector<128x128xbf16>
    %c0_18 = arith.constant 0 : index
    %c0_19 = arith.constant 0 : index
    %40 = vector.load %arg7[%c0_18, %c0_19] : memref<128x128xbf16, #tpu.memory_space<vmem>>, vector<128x128xbf16>
    %cst_20 = arith.constant dense<0.000000e+00> : vector<128x128xf32>
    %41 = tpu.matmul %39, %40, %cst_20 {dimension_numbers = #tpu.dot_dimension_numbers<[1], [0], [0], [1], [0, 0, 1, 1], [], []>} : vector<128x128xbf16>, vector<128x128xbf16>, vector<128x128xf32> -> vector<128x128xf32>
    %c0_21 = arith.constant 0 : index
    %c0_22 = arith.constant 0 : index
    %42 = vector.load %arg8[%c0_21, %c0_22] : memref<1x128xf32, #tpu.memory_space<vmem>>, vector<1x128xf32>
    %43 = vector.broadcast %42 : vector<1x128xf32> to vector<128x128xf32>
    %44 = arith.addf %41, %43 : vector<128x128xf32>
    %c0_23 = arith.constant 0 : index
    %c0_24 = arith.constant 0 : index
    %45 = vector.load %arg2[%c0_23, %c0_24] : memref<128x128xf32, #tpu.memory_space<vmem>>, vector<128x128xf32>
    %46 = arith.addf %44, %45 : vector<128x128xf32>
    %47 = arith.truncf %46 : vector<128x128xf32> to vector<128x128xbf16>
    %c0_25 = arith.constant 0 : index
    %c0_26 = arith.constant 0 : index
    %48 = vector.load %arg9[%c0_25, %c0_26] : memref<128x128xbf16, #tpu.memory_space<vmem>>, vector<128x128xbf16>
    %cst_27 = arith.constant dense<0.000000e+00> : vector<128x128xf32>
    %49 = tpu.matmul %47, %48, %cst_27 {dimension_numbers = #tpu.dot_dimension_numbers<[1], [0], [0], [1], [0, 0, 1, 1], [], []>} : vector<128x128xbf16>, vector<128x128xbf16>, vector<128x128xf32> -> vector<128x128xf32>
    %c0_28 = arith.constant 0 : index
    %c0_29 = arith.constant 0 : index
    %50 = vector.load %arg10[%c0_28, %c0_29] : memref<1x128xf32, #tpu.memory_space<vmem>>, vector<1x128xf32>
    %51 = vector.broadcast %50 : vector<1x128xf32> to vector<128x128xf32>
    %52 = arith.addf %49, %51 : vector<128x128xf32>
    %53 = arith.truncf %52 : vector<128x128xf32> to vector<128x128xbf16>
    %c0_30 = arith.constant 0 : index
    %c0_31 = arith.constant 0 : index
    %54 = vector.load %arg11[%c0_30, %c0_31] : memref<128x128xbf16, #tpu.memory_space<vmem>>, vector<128x128xbf16>
    tpu.vector_store %arg11[%c0_30, %c0_31], %53 {strides = array<i32>} : memref<128x128xbf16, #tpu.memory_space<vmem>>, vector<128x128xbf16>,
    return
  }
  func.func @transform_0(%arg0: i32) -> (i32, i32) {
    %c0_i32 = arith.constant 0 : i32
    %c0_i32_0 = arith.constant 0 : i32
    return %arg0, %c0_i32 : i32, i32
  }
  func.func @transform_1(%arg0: i32) -> (i32, i32) {
    %c0_i32 = arith.constant 0 : i32
    %c0_i32_0 = arith.constant 0 : i32
    return %arg0, %c0_i32 : i32, i32
  }
  func.func @transform_2(%arg0: i32) -> (i32, i32) {
    %c0_i32 = arith.constant 0 : i32
    %c0_i32_0 = arith.constant 0 : i32
    %c0_i32_1 = arith.constant 0 : i32
    return %c0_i32, %c0_i32_0 : i32, i32
  }
  func.func @transform_3(%arg0: i32) -> (i32, i32) {
    %c0_i32 = arith.constant 0 : i32
    %c0_i32_0 = arith.constant 0 : i32
    %c0_i32_1 = arith.constant 0 : i32
    return %c0_i32, %c0_i32_0 : i32, i32
  }
  func.func @transform_4(%arg0: i32) -> (i32, i32) {
    %c0_i32 = arith.constant 0 : i32
    %c0_i32_0 = arith.constant 0 : i32
    %c0_i32_1 = arith.constant 0 : i32
    return %c0_i32, %c0_i32_0 : i32, i32
  }
  func.func @transform_5(%arg0: i32) -> (i32, i32) {
    %c0_i32 = arith.constant 0 : i32
    %c0_i32_0 = arith.constant 0 : i32
    %c0_i32_1 = arith.constant 0 : i32
    return %c0_i32, %c0_i32_0 : i32, i32
  }
  func.func @transform_6(%arg0: i32) -> (i32, i32) {
    %c0_i32 = arith.constant 0 : i32
    %c0_i32_0 = arith.constant 0 : i32
    %c0_i32_1 = arith.constant 0 : i32
    return %c0_i32, %c0_i32_0 : i32, i32
  }
  func.func @transform_7(%arg0: i32) -> (i32, i32) {
    %c0_i32 = arith.constant 0 : i32
    %c0_i32_0 = arith.constant 0 : i32
    %c0_i32_1 = arith.constant 0 : i32
    return %c0_i32, %c0_i32_0 : i32, i32
  }
  func.func @transform_8(%arg0: i32) -> (i32, i32) {
    %c0_i32 = arith.constant 0 : i32
    %c0_i32_0 = arith.constant 0 : i32
    %c0_i32_1 = arith.constant 0 : i32
    return %c0_i32, %c0_i32_0 : i32, i32
  }
  func.func @transform_9(%arg0: i32) -> (i32, i32) {
    %c0_i32 = arith.constant 0 : i32
    %c0_i32_0 = arith.constant 0 : i32
    %c0_i32_1 = arith.constant 0 : i32
    return %c0_i32, %c0_i32_0 : i32, i32
  }
  func.func @transform_10(%arg0: i32) -> (i32, i32) {
    %c0_i32 = arith.constant 0 : i32
    %c0_i32_0 = arith.constant 0 : i32
    return %arg0, %c0_i32 : i32, i32
  }
}

</mosaic_0001>

<llo_original>
// kernel: tpu_custom_call.1
$region0: #{tpu_custom_call.1}
  #allocation0 [shape = 'u32[]', space=smem, size = 0x4, offset = 0x4, fixed_abs, tag = 'smem constant byte address 0x4 - core index']
  #allocation1 [shape = 'u32[144,128]{1,0:T(1,128)}', space=vmem, size = 0x12000, scoped, tag = 'internal scratch']
  %s0 = inlined_call_operand.vmem [shape: f32[128,4], index: 0, kind: input, shape index: {}]
  %s1 = inlined_call_operand.vmem [shape: f32[128,128], index: 1, kind: input, shape index: {}]
  %s2 = inlined_call_operand.vmem [shape: bf16[4,128], index: 2, kind: input, shape index: {}]
  %s3 = inlined_call_operand.vmem [shape: f32[1,128], index: 3, kind: input, shape index: {}]
  %s4 = inlined_call_operand.hbm [shape: bf16[128,128], index: 4, kind: input, shape index: {}]
  %s5 = inlined_call_operand.vmem [shape: f32[1,128], index: 5, kind: input, shape index: {}]
  %s6 = inlined_call_operand.hbm [shape: bf16[128,128], index: 6, kind: input, shape index: {}]
  %s7 = inlined_call_operand.vmem [shape: f32[1,128], index: 7, kind: input, shape index: {}]
  %s8 = inlined_call_operand.hbm [shape: bf16[128,128], index: 8, kind: input, shape index: {}]
  %s9 = inlined_call_operand.vmem [shape: f32[1,128], index: 9, kind: input, shape index: {}]
  %s10 = inlined_call_operand.hbm [shape: bf16[128,128], index: 10, kind: output, shape index: {}]
  %s11 = sld [smem:[#allocation0]]
  $region62: #{tpu_custom_call.1} parent=0
    _
  %s13 = ssub.s32 1, %s11
  %s14 = scalar_select 0, %s13, %s11
  $region1: #{tpu_custom_call.1} parent=0
    #allocation2 [shape = 'u8[32768]{0}', space=vmem, size = 0x8000, scoped, tag = 'input window, operand 4, single buffered']
    #allocation3 [shape = 's32[1]{0}', space=sflag, size = 0x4, scoped, tag = 'scoped memory for tpu_custom_call.1']
    #allocation4 [shape = 's32[1]{0}', space=sflag, size = 0x4, scoped, tag = 'scoped memory for tpu_custom_call.1']
    #allocation5 [shape = 'u8[32768]{0}', space=vmem, size = 0x8000, scoped, tag = 'input window, operand 6, single buffered']
    #allocation6 [shape = 's32[1]{0}', space=sflag, size = 0x4, scoped, tag = 'scoped memory for tpu_custom_call.1']
    #allocation7 [shape = 'u8[32768]{0}', space=vmem, size = 0x8000, scoped, tag = 'input window, operand 8, single buffered']
    #allocation8 [shape = 'u8[32768]{0}', space=vmem, size = 0x8000, scoped, tag = 'output window, operand 0, single buffered']
    %15 = vsyncpa [#allocation3], 0
    %16 = vsyncpa [#allocation6], 0
    %17 = vsyncpa [#allocation4], 0
    // Predicated region
    $region2: #{tpu_custom_call.1} parent=1 // pred_check
      _
    $region3: #{tpu_custom_call.1} parent=1 // pred_check_branch
      %19 = sbr.rel (0) target = $region5
    $region4: #{tpu_custom_call.1} parent=1 // pred_region
      _
    $region5: #{tpu_custom_call.1} parent=1 // pred_fallthru
      _
    // Predicated region
    $region6: #{tpu_custom_call.1} parent=1 // pred_check
      _
    $region7: #{tpu_custom_call.1} parent=1 // pred_check_branch
      %21 = sbr.rel (0) target = $region9
    $region8: #{tpu_custom_call.1} parent=1 // pred_region
      _
    $region9: #{tpu_custom_call.1} parent=1 // pred_fallthru
      _
    // Predicated region
    $region10: #{tpu_custom_call.1} parent=1 // pred_check
      _
    $region11: #{tpu_custom_call.1} parent=1 // pred_check_branch
      %23 = sbr.rel (0) target = $region13
    $region12: #{tpu_custom_call.1} parent=1 // pred_region
      _
    $region13: #{tpu_custom_call.1} parent=1 // pred_fallthru
      _
    // Predicated region
    $region14: #{tpu_custom_call.1} parent=1 // pred_check
      _
    $region15: #{tpu_custom_call.1} parent=1 // pred_check_branch
      %25 = sbr.rel (0) target = $region17
    $region16: #{tpu_custom_call.1} parent=1 // pred_region
      _
    $region17: #{tpu_custom_call.1} parent=1 // pred_fallthru
      _
    // Predicated region
    $region18: #{tpu_custom_call.1} parent=1 // pred_check
      _
    $region19: #{tpu_custom_call.1} parent=1 // pred_check_branch
      %27 = sbr.rel (0) target = $region21
    $region20: #{tpu_custom_call.1} parent=1 // pred_region
      %s29 = ssub.s32 1024, 1024
      %30 = vsyncadd [#allocation3], %s29
      %s31 = sshll.u32 [#allocation2], 4
      %s32 = int_to_ptr.vmem [resolvable:$true] %s31
      %37 = dma.hbm_to_vmem [thread:$0]  %s4, 1024, %s32, [#allocation3], 64, 64, 4
    $region21: #{tpu_custom_call.1} parent=1 // pred_fallthru
      _
    // Predicated region
    $region22: #{tpu_custom_call.1} parent=1 // pred_check
      _
    $region23: #{tpu_custom_call.1} parent=1 // pred_check_branch
      %39 = sbr.rel (0) target = $region25
    $region24: #{tpu_custom_call.1} parent=1 // pred_region
      _
    $region25: #{tpu_custom_call.1} parent=1 // pred_fallthru
      _
    // Predicated region
    $region26: #{tpu_custom_call.1} parent=1 // pred_check
      _
    $region27: #{tpu_custom_call.1} parent=1 // pred_check_branch
      %41 = sbr.rel (0) target = $region29
    $region28: #{tpu_custom_call.1} parent=1 // pred_region
      %s43 = ssub.s32 1024, 1024
      %44 = vsyncadd [#allocation6], %s43
      %s45 = sshll.u32 [#allocation5], 4
      %s46 = int_to_ptr.vmem [resolvable:$true] %s45
      %51 = dma.hbm_to_vmem [thread:$0]  %s6, 1024, %s46, [#allocation6], 64, 64, 4
    $region29: #{tpu_custom_call.1} parent=1 // pred_fallthru
      _
    // Predicated region
    $region30: #{tpu_custom_call.1} parent=1 // pred_check
      _
    $region31: #{tpu_custom_call.1} parent=1 // pred_check_branch
      %53 = sbr.rel (0) target = $region33
    $region32: #{tpu_custom_call.1} parent=1 // pred_region
      _
    $region33: #{tpu_custom_call.1} parent=1 // pred_fallthru
      _
    // Predicated region
    $region34: #{tpu_custom_call.1} parent=1 // pred_check
      _
    $region35: #{tpu_custom_call.1} parent=1 // pred_check_branch
      %55 = sbr.rel (0) target = $region37
    $region36: #{tpu_custom_call.1} parent=1 // pred_region
      %s57 = ssub.s32 1024, 1024
      %58 = vsyncadd [#allocation6], %s57
      %s59 = sshll.u32 [#allocation7], 4
      %s60 = int_to_ptr.vmem [resolvable:$true] %s59
      %65 = dma.hbm_to_vmem [thread:$0]  %s8, 1024, %s60, [#allocation6], 64, 64, 4
    $region37: #{tpu_custom_call.1} parent=1 // pred_fallthru
      _
    // Predicated region
    $region38: #{tpu_custom_call.1} parent=1 // pred_check
      _
    $region39: #{tpu_custom_call.1} parent=1 // pred_check_branch
      %67 = sbr.rel (0) target = $region41
    $region40: #{tpu_custom_call.1} parent=1 // pred_region
      _
    $region41: #{tpu_custom_call.1} parent=1 // pred_fallthru
      _
    // Predicated region
    $region42: #{tpu_custom_call.1} parent=1 // pred_check
      _
    $region43: #{tpu_custom_call.1} parent=1 // pred_check_branch
      %69 = sbr.rel (0) target = $region45
    $region44: #{tpu_custom_call.1} parent=1 // pred_region
      %70 = dma.done [#allocation3], 1024
    $region45: #{tpu_custom_call.1} parent=1 // pred_fallthru
      _
    // Predicated region
    $region46: #{tpu_custom_call.1} parent=1 // pred_check
      _
    $region47: #{tpu_custom_call.1} parent=1 // pred_check_branch
      %72 = sbr.rel (0) target = $region49
    $region48: #{tpu_custom_call.1} parent=1 // pred_region
      %73 = dma.done [#allocation6], 1024
    $region49: #{tpu_custom_call.1} parent=1 // pred_fallthru
      _
    // Predicated region
    $region50: #{tpu_custom_call.1} parent=1 // pred_check
      _
    $region51: #{tpu_custom_call.1} parent=1 // pred_check_branch
      %75 = sbr.rel (0) target = $region53
    $region52: #{tpu_custom_call.1} parent=1 // pred_region
      %76 = dma.done [#allocation6], 1024
    $region53: #{tpu_custom_call.1} parent=1 // pred_fallthru
      _
    %v78 = vld [vmem:[%s0] sm:$0xff]
    %v79 = vld [vmem:[%s0 + $0x8] sm:$0xff]
    %v80 = vld [vmem:[%s0 + $0x10] sm:$0xff]
    %v81 = vld [vmem:[%s0 + $0x18] sm:$0xff]
    %v82 = vld [vmem:[%s0 + $0x20] sm:$0xff]
    %v83 = vld [vmem:[%s0 + $0x28] sm:$0xff]
    %v84 = vld [vmem:[%s0 + $0x30] sm:$0xff]
    %v85 = vld [vmem:[%s0 + $0x38] sm:$0xff]
    %v86 = vld [vmem:[%s0 + $0x40] sm:$0xff]
    %v87 = vld [vmem:[%s0 + $0x48] sm:$0xff]
    %v88 = vld [vmem:[%s0 + $0x50] sm:$0xff]
    %v89 = vld [vmem:[%s0 + $0x58] sm:$0xff]
    %v90 = vld [vmem:[%s0 + $0x60] sm:$0xff]
    %v91 = vld [vmem:[%s0 + $0x68] sm:$0xff]
    %v92 = vld [vmem:[%s0 + $0x70] sm:$0xff]
    %v93 = vld [vmem:[%s0 + $0x78] sm:$0xff]
    %v94 = vpack.c.bf16 %v79, %v78
    %v95 = vpack.c.bf16 %v81, %v80
    %v96 = vpack.c.bf16 %v83, %v82
    %v97 = vpack.c.bf16 %v85, %v84
    %v98 = vpack.c.bf16 %v87, %v86
    %v99 = vpack.c.bf16 %v89, %v88
    %v100 = vpack.c.bf16 %v91, %v90
    %v101 = vpack.c.bf16 %v93, %v92
    %v102 = vld [vmem:[%s2] sm:$0x3]
    %v103 = vld [vmem:[%s3] sm:$0x1]
    %v105 = vlaneseq
    %v106 = vshrl.u32 %v105, 7
    %v107 = vsub.s32 0, %v106
    %v108 = vrot.slane %v103, %v107
    %vm110 = vcmask 31744
    %v112 = vsel %vm110, %v94, 0
    %v115 = vsel %vm110, %v95, 0
    %v118 = vsel %vm110, %v96, 0
    %v121 = vsel %vm110, %v97, 0
    %v124 = vsel %vm110, %v98, 0
    %v127 = vsel %vm110, %v99, 0
    %v130 = vsel %vm110, %v100, 0
    %v133 = vsel %vm110, %v101, 0
    %vm135 = vcmask 1041408
    %v137 = vsel %vm135, %v102, 0
    %139 = vmatprep.subr.bf16.mxu0 0
    %140 = vmatpush1.bf16.msra.mxu0 0
    %141 = vmatprep.subr.bf16.mxu0 0
    %142 = vmatpush1.bf16.msra.mxu0 0
    %143 = vmatprep.subr.bf16.mxu0 0
    %144 = vmatpush1.bf16.msra.mxu0 0
    %145 = vmatprep.subr.bf16.mxu0 0
    %146 = vmatpush1.bf16.msra.mxu0 0
    %147 = vmatprep.subr.bf16.mxu0 0
    %148 = vmatpush1.bf16.msra.mxu0 0
    %149 = vmatprep.subr.bf16.mxu0 0
    %150 = vmatpush1.bf16.msra.mxu0 0
    %151 = vmatprep.subr.bf16.mxu0 0
    %152 = vmatpush1.bf16.msra.mxu0 0
    %153 = vmatprep.subr.bf16.mxu0 0
    %154 = vmatpush1.bf16.msra.mxu0 %v137
    %155 = vmatprep.subr.bf16.mxu0 0
    %156 = vmatpush2.bf16.msra.mxu0 0
    %157 = vmatprep.subr.bf16.mxu0 0
    %158 = vmatpush2.bf16.msra.mxu0 0
    %159 = vmatprep.subr.bf16.mxu0 0
    %160 = vmatpush2.bf16.msra.mxu0 0
    %161 = vmatprep.subr.bf16.mxu0 0
    %162 = vmatpush2.bf16.msra.mxu0 0
    %163 = vmatprep.subr.bf16.mxu0 0
    %164 = vmatpush2.bf16.msra.mxu0 0
    %165 = vmatprep.subr.bf16.mxu0 0
    %166 = vmatpush2.bf16.msra.mxu0 0
    %167 = vmatprep.subr.bf16.mxu0 0
    %168 = vmatpush2.bf16.msra.mxu0 0
    %169 = vmatprep.subr.bf16.mxu0 0
    %170 = vmatpush2.bf16.msra.mxu0 0
    %171 = vmatprep.mubr.bf16.mxu0 0
    %172 = vmatmul.mubr.bf16.gmra.mxu0 %v112
    %v173 = vpop.f32.mrf.mxu0
    %v174 = vadd.f32 %v108, %v173
    %v175 = vpop.f32.mrf.mxu0
    %v176 = vpop.f32.mrf.mxu0
    %v177 = vadd.f32 %v108, %v176
    %v178 = vpop.f32.mrf.mxu0
    %179 = vmatprep.mubr.bf16.mxu0 0
    %180 = vmatmul.mubr.bf16.gmra.mxu0 %v115
    %v181 = vpop.f32.mrf.mxu0
    %v182 = vadd.f32 %v108, %v181
    %v183 = vpop.f32.mrf.mxu0
    %v184 = vpop.f32.mrf.mxu0
    %v185 = vadd.f32 %v108, %v184
    %v186 = vpop.f32.mrf.mxu0
    %187 = vmatprep.mubr.bf16.mxu0 0
    %188 = vmatmul.mubr.bf16.gmra.mxu0 %v118
    %v189 = vpop.f32.mrf.mxu0
    %v190 = vadd.f32 %v108, %v189
    %v191 = vpop.f32.mrf.mxu0
    %v192 = vpop.f32.mrf.mxu0
    %v193 = vadd.f32 %v108, %v192
    %v194 = vpop.f32.mrf.mxu0
    %195 = vmatprep.mubr.bf16.mxu0 0
    %196 = vmatmul.mubr.bf16.gmra.mxu0 %v121
    %v197 = vpop.f32.mrf.mxu0
    %v198 = vadd.f32 %v108, %v197
    %v199 = vpop.f32.mrf.mxu0
    %v200 = vpop.f32.mrf.mxu0
    %v201 = vadd.f32 %v108, %v200
    %v202 = vpop.f32.mrf.mxu0
    %203 = vmatprep.mubr.bf16.mxu0 0
    %204 = vmatmul.mubr.bf16.gmra.mxu0 %v124
    %v205 = vpop.f32.mrf.mxu0
    %v206 = vadd.f32 %v108, %v205
    %v207 = vpop.f32.mrf.mxu0
    %v208 = vpop.f32.mrf.mxu0
    %v209 = vadd.f32 %v108, %v208
    %v210 = vpop.f32.mrf.mxu0
    %211 = vmatprep.mubr.bf16.mxu0 0
    %212 = vmatmul.mubr.bf16.gmra.mxu0 %v127
    %v213 = vpop.f32.mrf.mxu0
    %v214 = vadd.f32 %v108, %v213
    %v215 = vpop.f32.mrf.mxu0
    %v216 = vpop.f32.mrf.mxu0
    %v217 = vadd.f32 %v108, %v216
    %v218 = vpop.f32.mrf.mxu0
    %219 = vmatprep.mubr.bf16.mxu0 0
    %220 = vmatmul.mubr.bf16.gmra.mxu0 %v130
    %v221 = vpop.f32.mrf.mxu0
    %v222 = vadd.f32 %v108, %v221
    %v223 = vpop.f32.mrf.mxu0
    %v224 = vpop.f32.mrf.mxu0
    %v225 = vadd.f32 %v108, %v224
    %v226 = vpop.f32.mrf.mxu0
    %227 = vmatprep.mubr.bf16.mxu0 0
    %228 = vmatmul.mubr.bf16.gmra.mxu0 %v133
    %v229 = vpop.f32.mrf.mxu0
    %v230 = vadd.f32 %v108, %v229
    %v231 = vpop.f32.mrf.mxu0
    %v232 = vpop.f32.mrf.mxu0
    %v233 = vadd.f32 %v108, %v232
    %v234 = vpop.f32.mrf.mxu0
    %235 = vdwg.mxu0
    %v236 = vmul.f32 %v174, 0.5
    %v237 = vmul.f32 %v177, 0.5
    %v238 = vmul.f32 %v182, 0.5
    %v239 = vmul.f32 %v185, 0.5
    %v240 = vmul.f32 %v190, 0.5
    %v241 = vmul.f32 %v193, 0.5
    %v242 = vmul.f32 %v198, 0.5
    %v243 = vmul.f32 %v201, 0.5
    %v244 = vmul.f32 %v206, 0.5
    %v245 = vmul.f32 %v209, 0.5
    %v246 = vmul.f32 %v214, 0.5
    %v247 = vmul.f32 %v217, 0.5
    %v248 = vmul.f32 %v222, 0.5
    %v249 = vmul.f32 %v225, 0.5
    %v250 = vmul.f32 %v230, 0.5
    %v251 = vmul.f32 %v233, 0.5
    %v252 = vmul.f32 %v174, 0.044715
    %v253 = vmul.f32 %v177, 0.044715
    %v254 = vmul.f32 %v182, 0.044715
    %v255 = vmul.f32 %v185, 0.044715
    %v256 = vmul.f32 %v190, 0.044715
    %v257 = vmul.f32 %v193, 0.044715
    %v258 = vmul.f32 %v198, 0.044715
    %v259 = vmul.f32 %v201, 0.044715
    %v260 = vmul.f32 %v206, 0.044715
    %v261 = vmul.f32 %v209, 0.044715
    %v262 = vmul.f32 %v214, 0.044715
    %v263 = vmul.f32 %v217, 0.044715
    %v264 = vmul.f32 %v222, 0.044715
    %v265 = vmul.f32 %v225, 0.044715
    %v266 = vmul.f32 %v230, 0.044715
    %v267 = vmul.f32 %v233, 0.044715
    %v268 = vmul.f32 %v252, %v174
    %v269 = vmul.f32 %v253, %v177
    %v270 = vmul.f32 %v254, %v182
    %v271 = vmul.f32 %v255, %v185
    %v272 = vmul.f32 %v256, %v190
    %v273 = vmul.f32 %v257, %v193
    %v274 = vmul.f32 %v258, %v198
    %v275 = vmul.f32 %v259, %v201
    %v276 = vmul.f32 %v260, %v206
    %v277 = vmul.f32 %v261, %v209
    %v278 = vmul.f32 %v262, %v214
    %v279 = vmul.f32 %v263, %v217
    %v280 = vmul.f32 %v264, %v222
    %v281 = vmul.f32 %v265, %v225
    %v282 = vmul.f32 %v266, %v230
    %v283 = vmul.f32 %v267, %v233
    %v284 = vmul.f32 %v268, %v174
    %v285 = vmul.f32 %v269, %v177
    %v286 = vmul.f32 %v270, %v182
    %v287 = vmul.f32 %v271, %v185
    %v288 = vmul.f32 %v272, %v190
    %v289 = vmul.f32 %v273, %v193
    %v290 = vmul.f32 %v274, %v198
    %v291 = vmul.f32 %v275, %v201
    %v292 = vmul.f32 %v276, %v206
    %v293 = vmul.f32 %v277, %v209
    %v294 = vmul.f32 %v278, %v214
    %v295 = vmul.f32 %v279, %v217
    %v296 = vmul.f32 %v280, %v222
    %v297 = vmul.f32 %v281, %v225
    %v298 = vmul.f32 %v282, %v230
    %v299 = vmul.f32 %v283, %v233
    %v300 = vadd.f32 %v174, %v284
    %v301 = vadd.f32 %v177, %v285
    %v302 = vadd.f32 %v182, %v286
    %v303 = vadd.f32 %v185, %v287
    %v304 = vadd.f32 %v190, %v288
    %v305 = vadd.f32 %v193, %v289
    %v306 = vadd.f32 %v198, %v290
    %v307 = vadd.f32 %v201, %v291
    %v308 = vadd.f32 %v206, %v292
    %v309 = vadd.f32 %v209, %v293
    %v310 = vadd.f32 %v214, %v294
    %v311 = vadd.f32 %v217, %v295
    %v312 = vadd.f32 %v222, %v296
    %v313 = vadd.f32 %v225, %v297
    %v314 = vadd.f32 %v230, %v298
    %v315 = vadd.f32 %v233, %v299
    %v316 = vmul.f32 %v300, 0.7978846
    %v317 = vmul.f32 %v301, 0.7978846
    %v318 = vmul.f32 %v302, 0.7978846
    %v319 = vmul.f32 %v303, 0.7978846
    %v320 = vmul.f32 %v304, 0.7978846
    %v321 = vmul.f32 %v305, 0.7978846
    %v322 = vmul.f32 %v306, 0.7978846
    %v323 = vmul.f32 %v307, 0.7978846
    %v324 = vmul.f32 %v308, 0.7978846
    %v325 = vmul.f32 %v309, 0.7978846
    %v326 = vmul.f32 %v310, 0.7978846
    %v327 = vmul.f32 %v311, 0.7978846
    %v328 = vmul.f32 %v312, 0.7978846
    %v329 = vmul.f32 %v313, 0.7978846
    %v330 = vmul.f32 %v314, 0.7978846
    %v331 = vmul.f32 %v315, 0.7978846
    %v332 = vtanh.pop %v316
    %v333 = vtanh.pop %v317
    %v334 = vtanh.pop %v318
    %v335 = vtanh.pop %v319
    %v336 = vtanh.pop %v320
    %v337 = vtanh.pop %v321
    %v338 = vtanh.pop %v322
    %v339 = vtanh.pop %v323
    %v340 = vtanh.pop %v324
    %v341 = vtanh.pop %v325
    %v342 = vtanh.pop %v326
    %v343 = vtanh.pop %v327
    %v344 = vtanh.pop %v328
    %v345 = vtanh.pop %v329
    %v346 = vtanh.pop %v330
    %v347 = vtanh.pop %v331
    %v348 = vadd.f32 %v332, 1.0
    %v349 = vadd.f32 %v333, 1.0
    %v350 = vadd.f32 %v334, 1.0
    %v351 = vadd.f32 %v335, 1.0
    %v352 = vadd.f32 %v336, 1.0
    %v353 = vadd.f32 %v337, 1.0
    %v354 = vadd.f32 %v338, 1.0
    %v355 = vadd.f32 %v339, 1.0
    %v356 = vadd.f32 %v340, 1.0
    %v357 = vadd.f32 %v341, 1.0
    %v358 = vadd.f32 %v342, 1.0
    %v359 = vadd.f32 %v343, 1.0
    %v360 = vadd.f32 %v344, 1.0
    %v361 = vadd.f32 %v345, 1.0
    %v362 = vadd.f32 %v346, 1.0
    %v363 = vadd.f32 %v347, 1.0
    %v364 = vmul.f32 %v236, %v348
    %v365 = vmul.f32 %v237, %v349
    %v366 = vmul.f32 %v238, %v350
    %v367 = vmul.f32 %v239, %v351
    %v368 = vmul.f32 %v240, %v352
    %v369 = vmul.f32 %v241, %v353
    %v370 = vmul.f32 %v242, %v354
    %v371 = vmul.f32 %v243, %v355
    %v372 = vmul.f32 %v244, %v356
    %v373 = vmul.f32 %v245, %v357
    %v374 = vmul.f32 %v246, %v358
    %v375 = vmul.f32 %v247, %v359
    %v376 = vmul.f32 %v248, %v360
    %v377 = vmul.f32 %v249, %v361
    %v378 = vmul.f32 %v250, %v362
    %v379 = vmul.f32 %v251, %v363
    %v380 = vpack.c.bf16 %v365, %v364
    %v381 = vpack.c.bf16 %v367, %v366
    %v382 = vpack.c.bf16 %v369, %v368
    %v383 = vpack.c.bf16 %v371, %v370
    %v384 = vpack.c.bf16 %v373, %v372
    %v385 = vpack.c.bf16 %v375, %v374
    %v386 = vpack.c.bf16 %v377, %v376
    %v387 = vpack.c.bf16 %v379, %v378
    %v388 = vld [vmem:[#allocation2] sm:$0xf]
    %v389 = vld [vmem:[#allocation2 + $0x4] sm:$0xf]
    %v390 = vld [vmem:[#allocation2 + $0x8] sm:$0xf]
    %v391 = vld [vmem:[#allocation2 + $0xc] sm:$0xf]
    %v392 = vld [vmem:[#allocation2 + $0x10] sm:$0xf]
    %v393 = vld [vmem:[#allocation2 + $0x14] sm:$0xf]
    %v394 = vld [vmem:[#allocation2 + $0x18] sm:$0xf]
    %v395 = vld [vmem:[#allocation2 + $0x1c] sm:$0xf]
    %v396 = vld [vmem:[#allocation2 + $0x20] sm:$0xf]
    %v397 = vld [vmem:[#allocation2 + $0x24] sm:$0xf]
    %v398 = vld [vmem:[#allocation2 + $0x28] sm:$0xf]
    %v399 = vld [vmem:[#allocation2 + $0x2c] sm:$0xf]
    %v400 = vld [vmem:[#allocation2 + $0x30] sm:$0xf]
    %v401 = vld [vmem:[#allocation2 + $0x34] sm:$0xf]
    %v402 = vld [vmem:[#allocation2 + $0x38] sm:$0xf]
    %v403 = vld [vmem:[#allocation2 + $0x3c] sm:$0xf]
    %v404 = vld [vmem:[%s5] sm:$0x1]
    %v406 = vlaneseq
    %v407 = vshrl.u32 %v406, 7
    %v408 = vsub.s32 0, %v407
    %v409 = vrot.slane %v404, %v408
    %v427 = vunpack.c.l.b16 %v388
    %v428 = vunpack.c.l.b16 %v389
    %v429 = vunpack.c.l.b16 %v390
    %v430 = vunpack.c.l.b16 %v391
    %v431 = vunpack.c.l.b16 %v392
    %v432 = vunpack.c.l.b16 %v393
    %v433 = vunpack.c.l.b16 %v394
    %v434 = vunpack.c.l.b16 %v395
    %v435 = vunpack.c.l.b16 %v396
    %v436 = vunpack.c.l.b16 %v397
    %v437 = vunpack.c.l.b16 %v398
    %v438 = vunpack.c.l.b16 %v399
    %v439 = vunpack.c.l.b16 %v400
    %v440 = vunpack.c.l.b16 %v401
    %v441 = vunpack.c.l.b16 %v402
    %v442 = vunpack.c.l.b16 %v403
    %v443 = vpack.c.b16 %v428, %v427
    %v444 = vpack.c.b16 %v430, %v429
    %v445 = vpack.c.b16 %v432, %v431
    %v446 = vpack.c.b16 %v434, %v433
    %v447 = vpack.c.b16 %v436, %v435
    %v448 = vpack.c.b16 %v438, %v437
    %v449 = vpack.c.b16 %v440, %v439
    %v450 = vpack.c.b16 %v442, %v441
    %459 = vmatprep.subr.bf16.mxu0 0
    %460 = vmatpush1.bf16.msra.mxu0 %v450
    %461 = vmatprep.subr.bf16.mxu0 0
    %462 = vmatpush1.bf16.msra.mxu0 %v449
    %463 = vmatprep.subr.bf16.mxu0 0
    %464 = vmatpush1.bf16.msra.mxu0 %v448
    %465 = vmatprep.subr.bf16.mxu0 0
    %466 = vmatpush1.bf16.msra.mxu0 %v447
    %467 = vmatprep.subr.bf16.mxu0 0
    %468 = vmatpush1.bf16.msra.mxu0 %v446
    %469 = vmatprep.subr.bf16.mxu0 0
    %470 = vmatpush1.bf16.msra.mxu0 %v445
    %471 = vmatprep.subr.bf16.mxu0 0
    %472 = vmatpush1.bf16.msra.mxu0 %v444
    %473 = vmatprep.subr.bf16.mxu0 0
    %474 = vmatpush1.bf16.msra.mxu0 %v443
    %475 = vmatprep.subr.bf16.mxu0 0
    %476 = vmatpush2.bf16.msra.mxu0 0
    %477 = vmatprep.subr.bf16.mxu0 0
    %478 = vmatpush2.bf16.msra.mxu0 0
    %479 = vmatprep.subr.bf16.mxu0 0
    %480 = vmatpush2.bf16.msra.mxu0 0
    %481 = vmatprep.subr.bf16.mxu0 0
    %482 = vmatpush2.bf16.msra.mxu0 0
    %483 = vmatprep.subr.bf16.mxu0 0
    %484 = vmatpush2.bf16.msra.mxu0 0
    %485 = vmatprep.subr.bf16.mxu0 0
    %486 = vmatpush2.bf16.msra.mxu0 0
    %487 = vmatprep.subr.bf16.mxu0 0
    %488 = vmatpush2.bf16.msra.mxu0 0
    %489 = vmatprep.subr.bf16.mxu0 0
    %490 = vmatpush2.bf16.msra.mxu0 0
    %491 = vmatprep.mubr.bf16.mxu0 0
    %492 = vmatmul.mubr.bf16.gmra.mxu0 %v380
    %v493 = vpop.f32.mrf.mxu0
    %v494 = vadd.f32 %v409, %v493
    %v495 = vpop.f32.mrf.mxu0
    %v496 = vpop.f32.mrf.mxu0
    %v497 = vadd.f32 %v409, %v496
    %v498 = vpop.f32.mrf.mxu0
    %499 = vmatprep.mubr.bf16.mxu0 0
    %500 = vmatmul.mubr.bf16.gmra.mxu0 %v381
    %v501 = vpop.f32.mrf.mxu0
    %v502 = vadd.f32 %v409, %v501
    %v503 = vpop.f32.mrf.mxu0
    %v504 = vpop.f32.mrf.mxu0
    %v505 = vadd.f32 %v409, %v504
    %v506 = vpop.f32.mrf.mxu0
    %507 = vmatprep.mubr.bf16.mxu0 0
    %508 = vmatmul.mubr.bf16.gmra.mxu0 %v382
    %v509 = vpop.f32.mrf.mxu0
    %v510 = vadd.f32 %v409, %v509
    %v511 = vpop.f32.mrf.mxu0
    %v512 = vpop.f32.mrf.mxu0
    %v513 = vadd.f32 %v409, %v512
    %v514 = vpop.f32.mrf.mxu0
    %515 = vmatprep.mubr.bf16.mxu0 0
    %516 = vmatmul.mubr.bf16.gmra.mxu0 %v383
    %v517 = vpop.f32.mrf.mxu0
    %v518 = vadd.f32 %v409, %v517
    %v519 = vpop.f32.mrf.mxu0
    %v520 = vpop.f32.mrf.mxu0
    %v521 = vadd.f32 %v409, %v520
    %v522 = vpop.f32.mrf.mxu0
    %523 = vmatprep.mubr.bf16.mxu0 0
    %524 = vmatmul.mubr.bf16.gmra.mxu0 %v384
    %v525 = vpop.f32.mrf.mxu0
    %v526 = vadd.f32 %v409, %v525
    %v527 = vpop.f32.mrf.mxu0
    %v528 = vpop.f32.mrf.mxu0
    %v529 = vadd.f32 %v409, %v528
    %v530 = vpop.f32.mrf.mxu0
    %531 = vmatprep.mubr.bf16.mxu0 0
    %532 = vmatmul.mubr.bf16.gmra.mxu0 %v385
    %v533 = vpop.f32.mrf.mxu0
    %v534 = vadd.f32 %v409, %v533
    %v535 = vpop.f32.mrf.mxu0
    %v536 = vpop.f32.mrf.mxu0
    %v537 = vadd.f32 %v409, %v536
    %v538 = vpop.f32.mrf.mxu0
    %539 = vmatprep.mubr.bf16.mxu0 0
    %540 = vmatmul.mubr.bf16.gmra.mxu0 %v386
    %v541 = vpop.f32.mrf.mxu0
    %v542 = vadd.f32 %v409, %v541
    %v543 = vpop.f32.mrf.mxu0
    %v544 = vpop.f32.mrf.mxu0
    %v545 = vadd.f32 %v409, %v544
    %v546 = vpop.f32.mrf.mxu0
    %547 = vmatprep.mubr.bf16.mxu0 0
    %548 = vmatmul.mubr.bf16.gmra.mxu0 %v387
    %v549 = vpop.f32.mrf.mxu0
    %v550 = vadd.f32 %v409, %v549
    %v551 = vpop.f32.mrf.mxu0
    %v552 = vpop.f32.mrf.mxu0
    %v553 = vadd.f32 %v409, %v552
    %v554 = vpop.f32.mrf.mxu0
    %555 = vdwg.mxu0
    %v556 = vmul.f32 %v494, 0.5
    %v557 = vmul.f32 %v497, 0.5
    %v558 = vmul.f32 %v502, 0.5
    %v559 = vmul.f32 %v505, 0.5
    %v560 = vmul.f32 %v510, 0.5
    %v561 = vmul.f32 %v513, 0.5
    %v562 = vmul.f32 %v518, 0.5
    %v563 = vmul.f32 %v521, 0.5
    %v564 = vmul.f32 %v526, 0.5
    %v565 = vmul.f32 %v529, 0.5
    %v566 = vmul.f32 %v534, 0.5
    %v567 = vmul.f32 %v537, 0.5
    %v568 = vmul.f32 %v542, 0.5
    %v569 = vmul.f32 %v545, 0.5
    %v570 = vmul.f32 %v550, 0.5
    %v571 = vmul.f32 %v553, 0.5
    %v572 = vmul.f32 %v494, 0.044715
    %v573 = vmul.f32 %v497, 0.044715
    %v574 = vmul.f32 %v502, 0.044715
    %v575 = vmul.f32 %v505, 0.044715
    %v576 = vmul.f32 %v510, 0.044715
    %v577 = vmul.f32 %v513, 0.044715
    %v578 = vmul.f32 %v518, 0.044715
    %v579 = vmul.f32 %v521, 0.044715
    %v580 = vmul.f32 %v526, 0.044715
    %v581 = vmul.f32 %v529, 0.044715
    %v582 = vmul.f32 %v534, 0.044715
    %v583 = vmul.f32 %v537, 0.044715
    %v584 = vmul.f32 %v542, 0.044715
    %v585 = vmul.f32 %v545, 0.044715
    %v586 = vmul.f32 %v550, 0.044715
    %v587 = vmul.f32 %v553, 0.044715
    %v588 = vmul.f32 %v572, %v494
    %v589 = vmul.f32 %v573, %v497
    %v590 = vmul.f32 %v574, %v502
    %v591 = vmul.f32 %v575, %v505
    %v592 = vmul.f32 %v576, %v510
    %v593 = vmul.f32 %v577, %v513
    %v594 = vmul.f32 %v578, %v518
    %v595 = vmul.f32 %v579, %v521
    %v596 = vmul.f32 %v580, %v526
    %v597 = vmul.f32 %v581, %v529
    %v598 = vmul.f32 %v582, %v534
    %v599 = vmul.f32 %v583, %v537
    %v600 = vmul.f32 %v584, %v542
    %v601 = vmul.f32 %v585, %v545
    %v602 = vmul.f32 %v586, %v550
    %v603 = vmul.f32 %v587, %v553
    %v604 = vmul.f32 %v588, %v494
    %v605 = vmul.f32 %v589, %v497
    %v606 = vmul.f32 %v590, %v502
    %v607 = vmul.f32 %v591, %v505
    %v608 = vmul.f32 %v592, %v510
    %v609 = vmul.f32 %v593, %v513
    %v610 = vmul.f32 %v594, %v518
    %v611 = vmul.f32 %v595, %v521
    %v612 = vmul.f32 %v596, %v526
    %v613 = vmul.f32 %v597, %v529
    %v614 = vmul.f32 %v598, %v534
    %v615 = vmul.f32 %v599, %v537
    %v616 = vmul.f32 %v600, %v542
    %v617 = vmul.f32 %v601, %v545
    %v618 = vmul.f32 %v602, %v550
    %v619 = vmul.f32 %v603, %v553
    %v620 = vadd.f32 %v494, %v604
    %v621 = vadd.f32 %v497, %v605
    %v622 = vadd.f32 %v502, %v606
    %v623 = vadd.f32 %v505, %v607
    %v624 = vadd.f32 %v510, %v608
    %v625 = vadd.f32 %v513, %v609
    %v626 = vadd.f32 %v518, %v610
    %v627 = vadd.f32 %v521, %v611
    %v628 = vadd.f32 %v526, %v612
    %v629 = vadd.f32 %v529, %v613
    %v630 = vadd.f32 %v534, %v614
    %v631 = vadd.f32 %v537, %v615
    %v632 = vadd.f32 %v542, %v616
    %v633 = vadd.f32 %v545, %v617
    %v634 = vadd.f32 %v550, %v618
    %v635 = vadd.f32 %v553, %v619
    %v636 = vmul.f32 %v620, 0.7978846
    %v637 = vmul.f32 %v621, 0.7978846
    %v638 = vmul.f32 %v622, 0.7978846
    %v639 = vmul.f32 %v623, 0.7978846
    %v640 = vmul.f32 %v624, 0.7978846
    %v641 = vmul.f32 %v625, 0.7978846
    %v642 = vmul.f32 %v626, 0.7978846
    %v643 = vmul.f32 %v627, 0.7978846
    %v644 = vmul.f32 %v628, 0.7978846
    %v645 = vmul.f32 %v629, 0.7978846
    %v646 = vmul.f32 %v630, 0.7978846
    %v647 = vmul.f32 %v631, 0.7978846
    %v648 = vmul.f32 %v632, 0.7978846
    %v649 = vmul.f32 %v633, 0.7978846
    %v650 = vmul.f32 %v634, 0.7978846
    %v651 = vmul.f32 %v635, 0.7978846
    %v652 = vtanh.pop %v636
    %v653 = vtanh.pop %v637
    %v654 = vtanh.pop %v638
    %v655 = vtanh.pop %v639
    %v656 = vtanh.pop %v640
    %v657 = vtanh.pop %v641
    %v658 = vtanh.pop %v642
    %v659 = vtanh.pop %v643
    %v660 = vtanh.pop %v644
    %v661 = vtanh.pop %v645
    %v662 = vtanh.pop %v646
    %v663 = vtanh.pop %v647
    %v664 = vtanh.pop %v648
    %v665 = vtanh.pop %v649
    %v666 = vtanh.pop %v650
    %v667 = vtanh.pop %v651
    %v668 = vadd.f32 %v652, 1.0
    %v669 = vadd.f32 %v653, 1.0
    %v670 = vadd.f32 %v654, 1.0
    %v671 = vadd.f32 %v655, 1.0
    %v672 = vadd.f32 %v656, 1.0
    %v673 = vadd.f32 %v657, 1.0
    %v674 = vadd.f32 %v658, 1.0
    %v675 = vadd.f32 %v659, 1.0
    %v676 = vadd.f32 %v660, 1.0
    %v677 = vadd.f32 %v661, 1.0
    %v678 = vadd.f32 %v662, 1.0
    %v679 = vadd.f32 %v663, 1.0
    %v680 = vadd.f32 %v664, 1.0
    %v681 = vadd.f32 %v665, 1.0
    %v682 = vadd.f32 %v666, 1.0
    %v683 = vadd.f32 %v667, 1.0
    %v684 = vmul.f32 %v556, %v668
    %v685 = vmul.f32 %v557, %v669
    %v686 = vmul.f32 %v558, %v670
    %v687 = vmul.f32 %v559, %v671
    %v688 = vmul.f32 %v560, %v672
    %v689 = vmul.f32 %v561, %v673
    %v690 = vmul.f32 %v562, %v674
    %v691 = vmul.f32 %v563, %v675
    %v692 = vmul.f32 %v564, %v676
    %v693 = vmul.f32 %v565, %v677
    %v694 = vmul.f32 %v566, %v678
    %v695 = vmul.f32 %v567, %v679
    %v696 = vmul.f32 %v568, %v680
    %v697 = vmul.f32 %v569, %v681
    %v698 = vmul.f32 %v570, %v682
    %v699 = vmul.f32 %v571, %v683
    %v700 = vpack.c.bf16 %v685, %v684
    %v701 = vpack.c.bf16 %v687, %v686
    %v702 = vpack.c.bf16 %v689, %v688
    %v703 = vpack.c.bf16 %v691, %v690
    %v704 = vpack.c.bf16 %v693, %v692
    %v705 = vpack.c.bf16 %v695, %v694
    %v706 = vpack.c.bf16 %v697, %v696
    %v707 = vpack.c.bf16 %v699, %v698
    %v708 = vld [vmem:[#allocation5] sm:$0xf]
    %v709 = vld [vmem:[#allocation5 + $0x4] sm:$0xf]
    %v710 = vld [vmem:[#allocation5 + $0x8] sm:$0xf]
    %v711 = vld [vmem:[#allocation5 + $0xc] sm:$0xf]
    %v712 = vld [vmem:[#allocation5 + $0x10] sm:$0xf]
    %v713 = vld [vmem:[#allocation5 + $0x14] sm:$0xf]
    %v714 = vld [vmem:[#allocation5 + $0x18] sm:$0xf]
    %v715 = vld [vmem:[#allocation5 + $0x1c] sm:$0xf]
    %v716 = vld [vmem:[#allocation5 + $0x20] sm:$0xf]
    %v717 = vld [vmem:[#allocation5 + $0x24] sm:$0xf]
    %v718 = vld [vmem:[#allocation5 + $0x28] sm:$0xf]
    %v719 = vld [vmem:[#allocation5 + $0x2c] sm:$0xf]
    %v720 = vld [vmem:[#allocation5 + $0x30] sm:$0xf]
    %v721 = vld [vmem:[#allocation5 + $0x34] sm:$0xf]
    %v722 = vld [vmem:[#allocation5 + $0x38] sm:$0xf]
    %v723 = vld [vmem:[#allocation5 + $0x3c] sm:$0xf]
    %v724 = vld [vmem:[%s7] sm:$0x1]
    %v726 = vlaneseq
    %v727 = vshrl.u32 %v726, 7
    %v728 = vsub.s32 0, %v727
    %v729 = vrot.slane %v724, %v728
    %v747 = vunpack.c.l.b16 %v708
    %v748 = vunpack.c.l.b16 %v709
    %v749 = vunpack.c.l.b16 %v710
    %v750 = vunpack.c.l.b16 %v711
    %v751 = vunpack.c.l.b16 %v712
    %v752 = vunpack.c.l.b16 %v713
    %v753 = vunpack.c.l.b16 %v714
    %v754 = vunpack.c.l.b16 %v715
    %v755 = vunpack.c.l.b16 %v716
    %v756 = vunpack.c.l.b16 %v717
    %v757 = vunpack.c.l.b16 %v718
    %v758 = vunpack.c.l.b16 %v719
    %v759 = vunpack.c.l.b16 %v720
    %v760 = vunpack.c.l.b16 %v721
    %v761 = vunpack.c.l.b16 %v722
    %v762 = vunpack.c.l.b16 %v723
    %v763 = vpack.c.b16 %v748, %v747
    %v764 = vpack.c.b16 %v750, %v749
    %v765 = vpack.c.b16 %v752, %v751
    %v766 = vpack.c.b16 %v754, %v753
    %v767 = vpack.c.b16 %v756, %v755
    %v768 = vpack.c.b16 %v758, %v757
    %v769 = vpack.c.b16 %v760, %v759
    %v770 = vpack.c.b16 %v762, %v761
    %779 = vmatprep.subr.bf16.mxu0 0
    %780 = vmatpush1.bf16.msra.mxu0 %v770
    %781 = vmatprep.subr.bf16.mxu0 0
    %782 = vmatpush1.bf16.msra.mxu0 %v769
    %783 = vmatprep.subr.bf16.mxu0 0
    %784 = vmatpush1.bf16.msra.mxu0 %v768
    %785 = vmatprep.subr.bf16.mxu0 0
    %786 = vmatpush1.bf16.msra.mxu0 %v767
    %787 = vmatprep.subr.bf16.mxu0 0
    %788 = vmatpush1.bf16.msra.mxu0 %v766
    %789 = vmatprep.subr.bf16.mxu0 0
    %790 = vmatpush1.bf16.msra.mxu0 %v765
    %791 = vmatprep.subr.bf16.mxu0 0
    %792 = vmatpush1.bf16.msra.mxu0 %v764
    %793 = vmatprep.subr.bf16.mxu0 0
    %794 = vmatpush1.bf16.msra.mxu0 %v763
    %795 = vmatprep.subr.bf16.mxu0 0
    %796 = vmatpush2.bf16.msra.mxu0 0
    %797 = vmatprep.subr.bf16.mxu0 0
    %798 = vmatpush2.bf16.msra.mxu0 0
    %799 = vmatprep.subr.bf16.mxu0 0
    %800 = vmatpush2.bf16.msra.mxu0 0
    %801 = vmatprep.subr.bf16.mxu0 0
    %802 = vmatpush2.bf16.msra.mxu0 0
    %803 = vmatprep.subr.bf16.mxu0 0
    %804 = vmatpush2.bf16.msra.mxu0 0
    %805 = vmatprep.subr.bf16.mxu0 0
    %806 = vmatpush2.bf16.msra.mxu0 0
    %807 = vmatprep.subr.bf16.mxu0 0
    %808 = vmatpush2.bf16.msra.mxu0 0
    %809 = vmatprep.subr.bf16.mxu0 0
    %810 = vmatpush2.bf16.msra.mxu0 0
    %811 = vmatprep.mubr.bf16.mxu0 0
    %812 = vmatmul.mubr.bf16.gmra.mxu0 %v700
    %v813 = vpop.f32.mrf.mxu0
    %v814 = vadd.f32 %v729, %v813
    %v815 = vpop.f32.mrf.mxu0
    %v816 = vpop.f32.mrf.mxu0
    %v817 = vadd.f32 %v729, %v816
    %v818 = vpop.f32.mrf.mxu0
    %819 = vmatprep.mubr.bf16.mxu0 0
    %820 = vmatmul.mubr.bf16.gmra.mxu0 %v701
    %v821 = vpop.f32.mrf.mxu0
    %v822 = vadd.f32 %v729, %v821
    %v823 = vpop.f32.mrf.mxu0
    %v824 = vpop.f32.mrf.mxu0
    %v825 = vadd.f32 %v729, %v824
    %v826 = vpop.f32.mrf.mxu0
    %827 = vmatprep.mubr.bf16.mxu0 0
    %828 = vmatmul.mubr.bf16.gmra.mxu0 %v702
    %v829 = vpop.f32.mrf.mxu0
    %v830 = vadd.f32 %v729, %v829
    %v831 = vpop.f32.mrf.mxu0
    %v832 = vpop.f32.mrf.mxu0
    %v833 = vadd.f32 %v729, %v832
    %v834 = vpop.f32.mrf.mxu0
    %835 = vmatprep.mubr.bf16.mxu0 0
    %836 = vmatmul.mubr.bf16.gmra.mxu0 %v703
    %v837 = vpop.f32.mrf.mxu0
    %v838 = vadd.f32 %v729, %v837
    %v839 = vpop.f32.mrf.mxu0
    %v840 = vpop.f32.mrf.mxu0
    %v841 = vadd.f32 %v729, %v840
    %v842 = vpop.f32.mrf.mxu0
    %843 = vmatprep.mubr.bf16.mxu0 0
    %844 = vmatmul.mubr.bf16.gmra.mxu0 %v704
    %v845 = vpop.f32.mrf.mxu0
    %v846 = vadd.f32 %v729, %v845
    %v847 = vpop.f32.mrf.mxu0
    %v848 = vpop.f32.mrf.mxu0
    %v849 = vadd.f32 %v729, %v848
    %v850 = vpop.f32.mrf.mxu0
    %851 = vmatprep.mubr.bf16.mxu0 0
    %852 = vmatmul.mubr.bf16.gmra.mxu0 %v705
    %v853 = vpop.f32.mrf.mxu0
    %v854 = vadd.f32 %v729, %v853
    %v855 = vpop.f32.mrf.mxu0
    %v856 = vpop.f32.mrf.mxu0
    %v857 = vadd.f32 %v729, %v856
    %v858 = vpop.f32.mrf.mxu0
    %859 = vmatprep.mubr.bf16.mxu0 0
    %860 = vmatmul.mubr.bf16.gmra.mxu0 %v706
    %v861 = vpop.f32.mrf.mxu0
    %v862 = vadd.f32 %v729, %v861
    %v863 = vpop.f32.mrf.mxu0
    %v864 = vpop.f32.mrf.mxu0
    %v865 = vadd.f32 %v729, %v864
    %v866 = vpop.f32.mrf.mxu0
    %867 = vmatprep.mubr.bf16.mxu0 0
    %868 = vmatmul.mubr.bf16.gmra.mxu0 %v707
    %v869 = vpop.f32.mrf.mxu0
    %v870 = vadd.f32 %v729, %v869
    %v871 = vpop.f32.mrf.mxu0
    %v872 = vpop.f32.mrf.mxu0
    %v873 = vadd.f32 %v729, %v872
    %v874 = vpop.f32.mrf.mxu0
    %875 = vdwg.mxu0
    %v876 = vld [vmem:[%s1] sm:$0xff]
    %v877 = vld [vmem:[%s1 + $0x8] sm:$0xff]
    %v878 = vld [vmem:[%s1 + $0x10] sm:$0xff]
    %v879 = vld [vmem:[%s1 + $0x18] sm:$0xff]
    %v880 = vld [vmem:[%s1 + $0x20] sm:$0xff]
    %v881 = vld [vmem:[%s1 + $0x28] sm:$0xff]
    %v882 = vld [vmem:[%s1 + $0x30] sm:$0xff]
    %v883 = vld [vmem:[%s1 + $0x38] sm:$0xff]
    %v884 = vld [vmem:[%s1 + $0x40] sm:$0xff]
    %v885 = vld [vmem:[%s1 + $0x48] sm:$0xff]
    %v886 = vld [vmem:[%s1 + $0x50] sm:$0xff]
    %v887 = vld [vmem:[%s1 + $0x58] sm:$0xff]
    %v888 = vld [vmem:[%s1 + $0x60] sm:$0xff]
    %v889 = vld [vmem:[%s1 + $0x68] sm:$0xff]
    %v890 = vld [vmem:[%s1 + $0x70] sm:$0xff]
    %v891 = vld [vmem:[%s1 + $0x78] sm:$0xff]
    %v892 = vadd.f32 %v814, %v876
    %v893 = vadd.f32 %v817, %v877
    %v894 = vadd.f32 %v822, %v878
    %v895 = vadd.f32 %v825, %v879
    %v896 = vadd.f32 %v830, %v880
    %v897 = vadd.f32 %v833, %v881
    %v898 = vadd.f32 %v838, %v882
    %v899 = vadd.f32 %v841, %v883
    %v900 = vadd.f32 %v846, %v884
    %v901 = vadd.f32 %v849, %v885
    %v902 = vadd.f32 %v854, %v886
    %v903 = vadd.f32 %v857, %v887
    %v904 = vadd.f32 %v862, %v888
    %v905 = vadd.f32 %v865, %v889
    %v906 = vadd.f32 %v870, %v890
    %v907 = vadd.f32 %v873, %v891
    %v908 = vpack.c.bf16 %v893, %v892
    %v909 = vpack.c.bf16 %v895, %v894
    %v910 = vpack.c.bf16 %v897, %v896
    %v911 = vpack.c.bf16 %v899, %v898
    %v912 = vpack.c.bf16 %v901, %v900
    %v913 = vpack.c.bf16 %v903, %v902
    %v914 = vpack.c.bf16 %v905, %v904
    %v915 = vpack.c.bf16 %v907, %v906
    %v916 = vld [vmem:[#allocation7] sm:$0xf]
    %v917 = vld [vmem:[#allocation7 + $0x4] sm:$0xf]
    %v918 = vld [vmem:[#allocation7 + $0x8] sm:$0xf]
    %v919 = vld [vmem:[#allocation7 + $0xc] sm:$0xf]
    %v920 = vld [vmem:[#allocation7 + $0x10] sm:$0xf]
    %v921 = vld [vmem:[#allocation7 + $0x14] sm:$0xf]
    %v922 = vld [vmem:[#allocation7 + $0x18] sm:$0xf]
    %v923 = vld [vmem:[#allocation7 + $0x1c] sm:$0xf]
    %v924 = vld [vmem:[#allocation7 + $0x20] sm:$0xf]
    %v925 = vld [vmem:[#allocation7 + $0x24] sm:$0xf]
    %v926 = vld [vmem:[#allocation7 + $0x28] sm:$0xf]
    %v927 = vld [vmem:[#allocation7 + $0x2c] sm:$0xf]
    %v928 = vld [vmem:[#allocation7 + $0x30] sm:$0xf]
    %v929 = vld [vmem:[#allocation7 + $0x34] sm:$0xf]
    %v930 = vld [vmem:[#allocation7 + $0x38] sm:$0xf]
    %v931 = vld [vmem:[#allocation7 + $0x3c] sm:$0xf]
    %v932 = vld [vmem:[%s9] sm:$0x1]
    %v934 = vlaneseq
    %v935 = vshrl.u32 %v934, 7
    %v936 = vsub.s32 0, %v935
    %v937 = vrot.slane %v932, %v936
    %v955 = vunpack.c.l.b16 %v916
    %v956 = vunpack.c.l.b16 %v917
    %v957 = vunpack.c.l.b16 %v918
    %v958 = vunpack.c.l.b16 %v919
    %v959 = vunpack.c.l.b16 %v920
    %v960 = vunpack.c.l.b16 %v921
    %v961 = vunpack.c.l.b16 %v922
    %v962 = vunpack.c.l.b16 %v923
    %v963 = vunpack.c.l.b16 %v924
    %v964 = vunpack.c.l.b16 %v925
    %v965 = vunpack.c.l.b16 %v926
    %v966 = vunpack.c.l.b16 %v927
    %v967 = vunpack.c.l.b16 %v928
    %v968 = vunpack.c.l.b16 %v929
    %v969 = vunpack.c.l.b16 %v930
    %v970 = vunpack.c.l.b16 %v931
    %v971 = vpack.c.b16 %v956, %v955
    %v972 = vpack.c.b16 %v958, %v957
    %v973 = vpack.c.b16 %v960, %v959
    %v974 = vpack.c.b16 %v962, %v961
    %v975 = vpack.c.b16 %v964, %v963
    %v976 = vpack.c.b16 %v966, %v965
    %v977 = vpack.c.b16 %v968, %v967
    %v978 = vpack.c.b16 %v970, %v969
    %987 = vmatprep.subr.bf16.mxu0 0
    %988 = vmatpush1.bf16.msra.mxu0 %v978
    %989 = vmatprep.subr.bf16.mxu0 0
    %990 = vmatpush1.bf16.msra.mxu0 %v977
    %991 = vmatprep.subr.bf16.mxu0 0
    %992 = vmatpush1.bf16.msra.mxu0 %v976
    %993 = vmatprep.subr.bf16.mxu0 0
    %994 = vmatpush1.bf16.msra.mxu0 %v975
    %995 = vmatprep.subr.bf16.mxu0 0
    %996 = vmatpush1.bf16.msra.mxu0 %v974
    %997 = vmatprep.subr.bf16.mxu0 0
    %998 = vmatpush1.bf16.msra.mxu0 %v973
    %999 = vmatprep.subr.bf16.mxu0 0
    %1000 = vmatpush1.bf16.msra.mxu0 %v972
    %1001 = vmatprep.subr.bf16.mxu0 0
    %1002 = vmatpush1.bf16.msra.mxu0 %v971
    %1003 = vmatprep.subr.bf16.mxu0 0
    %1004 = vmatpush2.bf16.msra.mxu0 0
    %1005 = vmatprep.subr.bf16.mxu0 0
    %1006 = vmatpush2.bf16.msra.mxu0 0
    %1007 = vmatprep.subr.bf16.mxu0 0
    %1008 = vmatpush2.bf16.msra.mxu0 0
    %1009 = vmatprep.subr.bf16.mxu0 0
    %1010 = vmatpush2.bf16.msra.mxu0 0
    %1011 = vmatprep.subr.bf16.mxu0 0
    %1012 = vmatpush2.bf16.msra.mxu0 0
    %1013 = vmatprep.subr.bf16.mxu0 0
    %1014 = vmatpush2.bf16.msra.mxu0 0
    %1015 = vmatprep.subr.bf16.mxu0 0
    %1016 = vmatpush2.bf16.msra.mxu0 0
    %1017 = vmatprep.subr.bf16.mxu0 0
    %1018 = vmatpush2.bf16.msra.mxu0 0
    %1019 = vmatprep.mubr.bf16.mxu0 0
    %1020 = vmatmul.mubr.bf16.gmra.mxu0 %v908
    %v1021 = vpop.f32.mrf.mxu0
    %v1022 = vadd.f32 %v937, %v1021
    %v1023 = vpop.f32.mrf.mxu0
    %v1024 = vpop.f32.mrf.mxu0
    %v1025 = vadd.f32 %v937, %v1024
    %v1026 = vpop.f32.mrf.mxu0
    %1027 = vmatprep.mubr.bf16.mxu0 0
    %1028 = vmatmul.mubr.bf16.gmra.mxu0 %v909
    %v1029 = vpop.f32.mrf.mxu0
    %v1030 = vadd.f32 %v937, %v1029
    %v1031 = vpop.f32.mrf.mxu0
    %v1032 = vpop.f32.mrf.mxu0
    %v1033 = vadd.f32 %v937, %v1032
    %v1034 = vpop.f32.mrf.mxu0
    %1035 = vmatprep.mubr.bf16.mxu0 0
    %1036 = vmatmul.mubr.bf16.gmra.mxu0 %v910
    %v1037 = vpop.f32.mrf.mxu0
    %v1038 = vadd.f32 %v937, %v1037
    %v1039 = vpop.f32.mrf.mxu0
    %v1040 = vpop.f32.mrf.mxu0
    %v1041 = vadd.f32 %v937, %v1040
    %v1042 = vpop.f32.mrf.mxu0
    %1043 = vmatprep.mubr.bf16.mxu0 0
    %1044 = vmatmul.mubr.bf16.gmra.mxu0 %v911
    %v1045 = vpop.f32.mrf.mxu0
    %v1046 = vadd.f32 %v937, %v1045
    %v1047 = vpop.f32.mrf.mxu0
    %v1048 = vpop.f32.mrf.mxu0
    %v1049 = vadd.f32 %v937, %v1048
    %v1050 = vpop.f32.mrf.mxu0
    %1051 = vmatprep.mubr.bf16.mxu0 0
    %1052 = vmatmul.mubr.bf16.gmra.mxu0 %v912
    %v1053 = vpop.f32.mrf.mxu0
    %v1054 = vadd.f32 %v937, %v1053
    %v1055 = vpop.f32.mrf.mxu0
    %v1056 = vpop.f32.mrf.mxu0
    %v1057 = vadd.f32 %v937, %v1056
    %v1058 = vpop.f32.mrf.mxu0
    %1059 = vmatprep.mubr.bf16.mxu0 0
    %1060 = vmatmul.mubr.bf16.gmra.mxu0 %v913
    %v1061 = vpop.f32.mrf.mxu0
    %v1062 = vadd.f32 %v937, %v1061
    %v1063 = vpop.f32.mrf.mxu0
    %v1064 = vpop.f32.mrf.mxu0
    %v1065 = vadd.f32 %v937, %v1064
    %v1066 = vpop.f32.mrf.mxu0
    %1067 = vmatprep.mubr.bf16.mxu0 0
    %1068 = vmatmul.mubr.bf16.gmra.mxu0 %v914
    %v1069 = vpop.f32.mrf.mxu0
    %v1070 = vadd.f32 %v937, %v1069
    %v1071 = vpop.f32.mrf.mxu0
    %v1072 = vpop.f32.mrf.mxu0
    %v1073 = vadd.f32 %v937, %v1072
    %v1074 = vpop.f32.mrf.mxu0
    %1075 = vmatprep.mubr.bf16.mxu0 0
    %1076 = vmatmul.mubr.bf16.gmra.mxu0 %v915
    %v1077 = vpop.f32.mrf.mxu0
    %v1078 = vadd.f32 %v937, %v1077
    %v1079 = vpop.f32.mrf.mxu0
    %v1080 = vpop.f32.mrf.mxu0
    %v1081 = vadd.f32 %v937, %v1080
    %v1082 = vpop.f32.mrf.mxu0
    %1083 = vdwg.mxu0
    %v1084 = vpack.c.bf16 %v1025, %v1022
    %v1085 = vpack.c.bf16 %v1033, %v1030
    %v1086 = vpack.c.bf16 %v1041, %v1038
    %v1087 = vpack.c.bf16 %v1049, %v1046
    %v1088 = vpack.c.bf16 %v1057, %v1054
    %v1089 = vpack.c.bf16 %v1065, %v1062
    %v1090 = vpack.c.bf16 %v1073, %v1070
    %v1091 = vpack.c.bf16 %v1081, %v1078
    %v1100 = vunpack.c.l.b16 %v1084
    %v1101 = vunpack.c.h.b16 %v1084
    %v1102 = vunpack.c.l.b16 %v1085
    %v1103 = vunpack.c.h.b16 %v1085
    %v1104 = vunpack.c.l.b16 %v1086
    %v1105 = vunpack.c.h.b16 %v1086
    %v1106 = vunpack.c.l.b16 %v1087
    %v1107 = vunpack.c.h.b16 %v1087
    %v1108 = vunpack.c.l.b16 %v1088
    %v1109 = vunpack.c.h.b16 %v1088
    %v1110 = vunpack.c.l.b16 %v1089
    %v1111 = vunpack.c.h.b16 %v1089
    %v1112 = vunpack.c.l.b16 %v1090
    %v1113 = vunpack.c.h.b16 %v1090
    %v1114 = vunpack.c.l.b16 %v1091
    %v1115 = vunpack.c.h.b16 %v1091
    %v1116 = vpack.c.b16 %v1100, %v1100
    %v1117 = vpack.c.b16 %v1101, %v1101
    %v1118 = vpack.c.b16 %v1102, %v1102
    %v1119 = vpack.c.b16 %v1103, %v1103
    %v1120 = vpack.c.b16 %v1104, %v1104
    %v1121 = vpack.c.b16 %v1105, %v1105
    %v1122 = vpack.c.b16 %v1106, %v1106
    %v1123 = vpack.c.b16 %v1107, %v1107
    %v1124 = vpack.c.b16 %v1108, %v1108
    %v1125 = vpack.c.b16 %v1109, %v1109
    %v1126 = vpack.c.b16 %v1110, %v1110
    %v1127 = vpack.c.b16 %v1111, %v1111
    %v1128 = vpack.c.b16 %v1112, %v1112
    %v1129 = vpack.c.b16 %v1113, %v1113
    %v1130 = vpack.c.b16 %v1114, %v1114
    %v1131 = vpack.c.b16 %v1115, %v1115
    %1148 = vst [vmem:[#allocation8] sm:$0xf] %v1116
    %1149 = vst [vmem:[#allocation8 + $0x4] sm:$0xf] %v1117
    %1150 = vst [vmem:[#allocation8 + $0x8] sm:$0xf] %v1118
    %1151 = vst [vmem:[#allocation8 + $0xc] sm:$0xf] %v1119
    %1152 = vst [vmem:[#allocation8 + $0x10] sm:$0xf] %v1120
    %1153 = vst [vmem:[#allocation8 + $0x14] sm:$0xf] %v1121
    %1154 = vst [vmem:[#allocation8 + $0x18] sm:$0xf] %v1122
    %1155 = vst [vmem:[#allocation8 + $0x1c] sm:$0xf] %v1123
    %1156 = vst [vmem:[#allocation8 + $0x20] sm:$0xf] %v1124
    %1157 = vst [vmem:[#allocation8 + $0x24] sm:$0xf] %v1125
    %1158 = vst [vmem:[#allocation8 + $0x28] sm:$0xf] %v1126
    %1159 = vst [vmem:[#allocation8 + $0x2c] sm:$0xf] %v1127
    %1160 = vst [vmem:[#allocation8 + $0x30] sm:$0xf] %v1128
    %1161 = vst [vmem:[#allocation8 + $0x34] sm:$0xf] %v1129
    %1162 = vst [vmem:[#allocation8 + $0x38] sm:$0xf] %v1130
    %1163 = vst [vmem:[#allocation8 + $0x3c] sm:$0xf] %v1131
    // Predicated region
    $region54: #{tpu_custom_call.1} parent=1 // pred_check
      _
    $region55: #{tpu_custom_call.1} parent=1 // pred_check_branch
      %1165 = sbr.rel (0) target = $region57
    $region56: #{tpu_custom_call.1} parent=1 // pred_region
      %s1167 = ssub.s32 1024, 1024
      %1168 = vsyncadd [#allocation4], %s1167
      %s1169 = sshll.u32 [#allocation8], 4
      %s1170 = int_to_ptr.vmem [resolvable:$true] %s1169
      %1175 = dma.vmem_to_hbm [thread:$0]  %s1170, 1024, %s10, [#allocation4], 64, 64, 4
    $region57: #{tpu_custom_call.1} parent=1 // pred_fallthru
      _
    // Predicated region
    $region58: #{tpu_custom_call.1} parent=1 // pred_check
      _
    $region59: #{tpu_custom_call.1} parent=1 // pred_check_branch
      %1177 = sbr.rel (0) target = $region61
    $region60: #{tpu_custom_call.1} parent=1 // pred_region
      %1178 = dma.done [#allocation4], 1024
    $region61: #{tpu_custom_call.1} parent=1 // pred_fallthru
      _
    %1179 = vsyncpa [#allocation3], 1
    %1180 = vsyncpa [#allocation6], 1
    %1181 = vsyncpa [#allocation4], 1

// kernel: tpu_custom_call.1
$region0: #{tpu_custom_call.1}
  #allocation0 [shape = 'u32[]', space=smem, size = 0x4, offset = 0x4, fixed_abs, tag = 'smem constant byte address 0x4 - core index']
  #allocation1 [shape = 'u32[144,128]{1,0:T(1,128)}', space=vmem, size = 0x12000, scoped, tag = 'internal scratch']
  %s0 = inlined_call_operand.vmem [shape: f32[128,4], index: 0, kind: input, shape index: {}]
  %s1 = inlined_call_operand.vmem [shape: f32[128,128], index: 1, kind: input, shape index: {}]
  %s2 = inlined_call_operand.vmem [shape: bf16[4,128], index: 2, kind: input, shape index: {}]
  %s3 = inlined_call_operand.vmem [shape: f32[1,128], index: 3, kind: input, shape index: {}]
  %s4 = inlined_call_operand.hbm [shape: bf16[128,128], index: 4, kind: input, shape index: {}]
  %s5 = inlined_call_operand.vmem [shape: f32[1,128], index: 5, kind: input, shape index: {}]
  %s6 = inlined_call_operand.hbm [shape: bf16[128,128], index: 6, kind: input, shape index: {}]
  %s7 = inlined_call_operand.vmem [shape: f32[1,128], index: 7, kind: input, shape index: {}]
  %s8 = inlined_call_operand.hbm [shape: bf16[128,128], index: 8, kind: input, shape index: {}]
  %s9 = inlined_call_operand.vmem [shape: f32[1,128], index: 9, kind: input, shape index: {}]
  %s10 = inlined_call_operand.hbm [shape: bf16[128,128], index: 10, kind: output, shape index: {}]
  %s11 = sld [smem:[#allocation0]]
  $region62: #{tpu_custom_call.1} parent=0
    _
  %s13 = ssub.s32 1, %s11
  %s14 = scalar_select 0, %s13, %s11
  $region1: #{tpu_custom_call.1} parent=0
    #allocation2 [shape = 'u8[32768]{0}', space=vmem, size = 0x8000, scoped, tag = 'input window, operand 4, single buffered']
    #allocation3 [shape = 's32[1]{0}', space=sflag, size = 0x4, scoped, tag = 'scoped memory for tpu_custom_call.1']
    #allocation4 [shape = 's32[1]{0}', space=sflag, size = 0x4, scoped, tag = 'scoped memory for tpu_custom_call.1']
    #allocation5 [shape = 'u8[32768]{0}', space=vmem, size = 0x8000, scoped, tag = 'input window, operand 6, single buffered']
    #allocation6 [shape = 's32[1]{0}', space=sflag, size = 0x4, scoped, tag = 'scoped memory for tpu_custom_call.1']
    #allocation7 [shape = 'u8[32768]{0}', space=vmem, size = 0x8000, scoped, tag = 'input window, operand 8, single buffered']
    #allocation8 [shape = 'u8[32768]{0}', space=vmem, size = 0x8000, scoped, tag = 'output window, operand 0, single buffered']
    %15 = vsyncpa [#allocation3], 0
    %16 = vsyncpa [#allocation6], 0
    %17 = vsyncpa [#allocation4], 0
    // Predicated region
    $region2: #{tpu_custom_call.1} parent=1 // pred_check
      _
    $region3: #{tpu_custom_call.1} parent=1 // pred_check_branch
      %19 = sbr.rel (0) target = $region5
    $region4: #{tpu_custom_call.1} parent=1 // pred_region
      _
    $region5: #{tpu_custom_call.1} parent=1 // pred_fallthru
      _
    // Predicated region
    $region6: #{tpu_custom_call.1} parent=1 // pred_check
      _
    $region7: #{tpu_custom_call.1} parent=1 // pred_check_branch
      %21 = sbr.rel (0) target = $region9
    $region8: #{tpu_custom_call.1} parent=1 // pred_region
      _
    $region9: #{tpu_custom_call.1} parent=1 // pred_fallthru
      _
    // Predicated region
    $region10: #{tpu_custom_call.1} parent=1 // pred_check
      _
    $region11: #{tpu_custom_call.1} parent=1 // pred_check_branch
      %23 = sbr.rel (0) target = $region13
    $region12: #{tpu_custom_call.1} parent=1 // pred_region
      _
    $region13: #{tpu_custom_call.1} parent=1 // pred_fallthru
      _
    // Predicated region
    $region14: #{tpu_custom_call.1} parent=1 // pred_check
      _
    $region15: #{tpu_custom_call.1} parent=1 // pred_check_branch
      %25 = sbr.rel (0) target = $region17
    $region16: #{tpu_custom_call.1} parent=1 // pred_region
      _
    $region17: #{tpu_custom_call.1} parent=1 // pred_fallthru
      _
    // Predicated region
    $region18: #{tpu_custom_call.1} parent=1 // pred_check
      _
    $region19: #{tpu_custom_call.1} parent=1 // pred_check_branch
      %27 = sbr.rel (0) target = $region21
    $region20: #{tpu_custom_call.1} parent=1 // pred_region
      %s29 = ssub.s32 1024, 1024
      %30 = vsyncadd [#allocation3], %s29
      %s31 = sshll.u32 [#allocation2], 4
      %s32 = int_to_ptr.vmem [resolvable:$true] %s31
      %37 = dma.hbm_to_vmem [thread:$0]  %s4, 1024, %s32, [#allocation3], 64, 64, 4
    $region21: #{tpu_custom_call.1} parent=1 // pred_fallthru
      _
    // Predicated region
    $region22: #{tpu_custom_call.1} parent=1 // pred_check
      _
    $region23: #{tpu_custom_call.1} parent=1 // pred_check_branch
      %39 = sbr.rel (0) target = $region25
    $region24: #{tpu_custom_call.1} parent=1 // pred_region
      _
    $region25: #{tpu_custom_call.1} parent=1 // pred_fallthru
      _
    // Predicated region
    $region26: #{tpu_custom_call.1} parent=1 // pred_check
      _
    $region27: #{tpu_custom_call.1} parent=1 // pred_check_branch
      %41 = sbr.rel (0) target = $region29
    $region28: #{tpu_custom_call.1} parent=1 // pred_region
      %s43 = ssub.s32 1024, 1024
      %44 = vsyncadd [#allocation6], %s43
      %s45 = sshll.u32 [#allocation5], 4
      %s46 = int_to_ptr.vmem [resolvable:$true] %s45
      %51 = dma.hbm_to_vmem [thread:$0]  %s6, 1024, %s46, [#allocation6], 64, 64, 4
    $region29: #{tpu_custom_call.1} parent=1 // pred_fallthru
      _
    // Predicated region
    $region30: #{tpu_custom_call.1} parent=1 // pred_check
      _
    $region31: #{tpu_custom_call.1} parent=1 // pred_check_branch
      %53 = sbr.rel (0) target = $region33
    $region32: #{tpu_custom_call.1} parent=1 // pred_region
      _
    $region33: #{tpu_custom_call.1} parent=1 // pred_fallthru
      _
    // Predicated region
    $region34: #{tpu_custom_call.1} parent=1 // pred_check
      _
    $region35: #{tpu_custom_call.1} parent=1 // pred_check_branch
      %55 = sbr.rel (0) target = $region37
    $region36: #{tpu_custom_call.1} parent=1 // pred_region
      %s57 = ssub.s32 1024, 1024
      %58 = vsyncadd [#allocation6], %s57
      %s59 = sshll.u32 [#allocation7], 4
      %s60 = int_to_ptr.vmem [resolvable:$true] %s59
      %65 = dma.hbm_to_vmem [thread:$0]  %s8, 1024, %s60, [#allocation6], 64, 64, 4
    $region37: #{tpu_custom_call.1} parent=1 // pred_fallthru
      _
    // Predicated region
    $region38: #{tpu_custom_call.1} parent=1 // pred_check
      _
    $region39: #{tpu_custom_call.1} parent=1 // pred_check_branch
      %67 = sbr.rel (0) target = $region41
    $region40: #{tpu_custom_call.1} parent=1 // pred_region
      _
    $region41: #{tpu_custom_call.1} parent=1 // pred_fallthru
      _
    // Predicated region
    $region42: #{tpu_custom_call.1} parent=1 // pred_check
      _
    $region43: #{tpu_custom_call.1} parent=1 // pred_check_branch
      %69 = sbr.rel (0) target = $region45
    $region44: #{tpu_custom_call.1} parent=1 // pred_region
      %70 = dma.done [#allocation3], 1024
    $region45: #{tpu_custom_call.1} parent=1 // pred_fallthru
      _
    // Predicated region
    $region46: #{tpu_custom_call.1} parent=1 // pred_check
      _
    $region47: #{tpu_custom_call.1} parent=1 // pred_check_branch
      %72 = sbr.rel (0) target = $region49
    $region48: #{tpu_custom_call.1} parent=1 // pred_region
      %73 = dma.done [#allocation6], 1024
    $region49: #{tpu_custom_call.1} parent=1 // pred_fallthru
      _
    // Predicated region
    $region50: #{tpu_custom_call.1} parent=1 // pred_check
      _
    $region51: #{tpu_custom_call.1} parent=1 // pred_check_branch
      %75 = sbr.rel (0) target = $region53
    $region52: #{tpu_custom_call.1} parent=1 // pred_region
      %76 = dma.done [#allocation6], 1024
    $region53: #{tpu_custom_call.1} parent=1 // pred_fallthru
      _
    %v78 = vld [vmem:[%s0] sm:$0xff]
    %v79 = vld [vmem:[%s0 + $0x8] sm:$0xff]
    %v80 = vld [vmem:[%s0 + $0x10] sm:$0xff]
    %v81 = vld [vmem:[%s0 + $0x18] sm:$0xff]
    %v82 = vld [vmem:[%s0 + $0x20] sm:$0xff]
    %v83 = vld [vmem:[%s0 + $0x28] sm:$0xff]
    %v84 = vld [vmem:[%s0 + $0x30] sm:$0xff]
    %v85 = vld [vmem:[%s0 + $0x38] sm:$0xff]
    %v86 = vld [vmem:[%s0 + $0x40] sm:$0xff]
    %v87 = vld [vmem:[%s0 + $0x48] sm:$0xff]
    %v88 = vld [vmem:[%s0 + $0x50] sm:$0xff]
    %v89 = vld [vmem:[%s0 + $0x58] sm:$0xff]
    %v90 = vld [vmem:[%s0 + $0x60] sm:$0xff]
    %v91 = vld [vmem:[%s0 + $0x68] sm:$0xff]
    %v92 = vld [vmem:[%s0 + $0x70] sm:$0xff]
    %v93 = vld [vmem:[%s0 + $0x78] sm:$0xff]
    %v94 = vpack.c.bf16 %v79, %v78
    %v95 = vpack.c.bf16 %v81, %v80
    %v96 = vpack.c.bf16 %v83, %v82
    %v97 = vpack.c.bf16 %v85, %v84
    %v98 = vpack.c.bf16 %v87, %v86
    %v99 = vpack.c.bf16 %v89, %v88
    %v100 = vpack.c.bf16 %v91, %v90
    %v101 = vpack.c.bf16 %v93, %v92
    %v102 = vld [vmem:[%s2] sm:$0x3]
    %v103 = vld [vmem:[%s3] sm:$0x1]
    %v105 = vlaneseq
    %v106 = vshrl.u32 %v105, 7
    %v107 = vsub.s32 0, %v106
    %v108 = vrot.slane %v103, %v107
    %vm110 = vcmask 31744
    %v112 = vsel %vm110, %v94, 0
    %v115 = vsel %vm110, %v95, 0
    %v118 = vsel %vm110, %v96, 0
    %v121 = vsel %vm110, %v97, 0
    %v124 = vsel %vm110, %v98, 0
    %v127 = vsel %vm110, %v99, 0
    %v130 = vsel %vm110, %v100, 0
    %v133 = vsel %vm110, %v101, 0
    %vm135 = vcmask 1041408
    %v137 = vsel %vm135, %v102, 0
    %139 = vmatprep.subr.bf16.mxu0 0
    %140 = vmatpush1.bf16.msra.mxu0 0
    %141 = vmatprep.subr.bf16.mxu0 0
    %142 = vmatpush1.bf16.msra.mxu0 0
    %143 = vmatprep.subr.bf16.mxu0 0
    %144 = vmatpush1.bf16.msra.mxu0 0
    %145 = vmatprep.subr.bf16.mxu0 0
    %146 = vmatpush1.bf16.msra.mxu0 0
    %147 = vmatprep.subr.bf16.mxu0 0
    %148 = vmatpush1.bf16.msra.mxu0 0
    %149 = vmatprep.subr.bf16.mxu0 0
    %150 = vmatpush1.bf16.msra.mxu0 0
    %151 = vmatprep.subr.bf16.mxu0 0
    %152 = vmatpush1.bf16.msra.mxu0 0
    %153 = vmatprep.subr.bf16.mxu0 0
    %154 = vmatpush1.bf16.msra.mxu0 %v137
    %155 = vmatprep.subr.bf16.mxu0 0
    %156 = vmatpush2.bf16.msra.mxu0 0
    %157 = vmatprep.subr.bf16.mxu0 0
    %158 = vmatpush2.bf16.msra.mxu0 0
    %159 = vmatprep.subr.bf16.mxu0 0
    %160 = vmatpush2.bf16.msra.mxu0 0
    %161 = vmatprep.subr.bf16.mxu0 0
    %162 = vmatpush2.bf16.msra.mxu0 0
    %163 = vmatprep.subr.bf16.mxu0 0
    %164 = vmatpush2.bf16.msra.mxu0 0
    %165 = vmatprep.subr.bf16.mxu0 0
    %166 = vmatpush2.bf16.msra.mxu0 0
    %167 = vmatprep.subr.bf16.mxu0 0
    %168 = vmatpush2.bf16.msra.mxu0 0
    %169 = vmatprep.subr.bf16.mxu0 0
    %170 = vmatpush2.bf16.msra.mxu0 0
    %171 = vmatprep.mubr.bf16.mxu0 0
    %172 = vmatmul.mubr.bf16.gmra.mxu0 %v112
    %v173 = vpop.f32.mrf.mxu0
    %v174 = vadd.f32 %v108, %v173
    %v175 = vpop.f32.mrf.mxu0
    %v176 = vpop.f32.mrf.mxu0
    %v177 = vadd.f32 %v108, %v176
    %v178 = vpop.f32.mrf.mxu0
    %179 = vmatprep.mubr.bf16.mxu0 0
    %180 = vmatmul.mubr.bf16.gmra.mxu0 %v115
    %v181 = vpop.f32.mrf.mxu0
    %v182 = vadd.f32 %v108, %v181
    %v183 = vpop.f32.mrf.mxu0
    %v184 = vpop.f32.mrf.mxu0
    %v185 = vadd.f32 %v108, %v184
    %v186 = vpop.f32.mrf.mxu0
    %187 = vmatprep.mubr.bf16.mxu0 0
    %188 = vmatmul.mubr.bf16.gmra.mxu0 %v118
    %v189 = vpop.f32.mrf.mxu0
    %v190 = vadd.f32 %v108, %v189
    %v191 = vpop.f32.mrf.mxu0
    %v192 = vpop.f32.mrf.mxu0
    %v193 = vadd.f32 %v108, %v192
    %v194 = vpop.f32.mrf.mxu0
    %195 = vmatprep.mubr.bf16.mxu0 0
    %196 = vmatmul.mubr.bf16.gmra.mxu0 %v121
    %v197 = vpop.f32.mrf.mxu0
    %v198 = vadd.f32 %v108, %v197
    %v199 = vpop.f32.mrf.mxu0
    %v200 = vpop.f32.mrf.mxu0
    %v201 = vadd.f32 %v108, %v200
    %v202 = vpop.f32.mrf.mxu0
    %203 = vmatprep.mubr.bf16.mxu0 0
    %204 = vmatmul.mubr.bf16.gmra.mxu0 %v124
    %v205 = vpop.f32.mrf.mxu0
    %v206 = vadd.f32 %v108, %v205
    %v207 = vpop.f32.mrf.mxu0
    %v208 = vpop.f32.mrf.mxu0
    %v209 = vadd.f32 %v108, %v208
    %v210 = vpop.f32.mrf.mxu0
    %211 = vmatprep.mubr.bf16.mxu0 0
    %212 = vmatmul.mubr.bf16.gmra.mxu0 %v127
    %v213 = vpop.f32.mrf.mxu0
    %v214 = vadd.f32 %v108, %v213
    %v215 = vpop.f32.mrf.mxu0
    %v216 = vpop.f32.mrf.mxu0
    %v217 = vadd.f32 %v108, %v216
    %v218 = vpop.f32.mrf.mxu0
    %219 = vmatprep.mubr.bf16.mxu0 0
    %220 = vmatmul.mubr.bf16.gmra.mxu0 %v130
    %v221 = vpop.f32.mrf.mxu0
    %v222 = vadd.f32 %v108, %v221
    %v223 = vpop.f32.mrf.mxu0
    %v224 = vpop.f32.mrf.mxu0
    %v225 = vadd.f32 %v108, %v224
    %v226 = vpop.f32.mrf.mxu0
    %227 = vmatprep.mubr.bf16.mxu0 0
    %228 = vmatmul.mubr.bf16.gmra.mxu0 %v133
    %v229 = vpop.f32.mrf.mxu0
    %v230 = vadd.f32 %v108, %v229
    %v231 = vpop.f32.mrf.mxu0
    %v232 = vpop.f32.mrf.mxu0
    %v233 = vadd.f32 %v108, %v232
    %v234 = vpop.f32.mrf.mxu0
    %235 = vdwg.mxu0
    %v236 = vmul.f32 %v174, 0.5
    %v237 = vmul.f32 %v177, 0.5
    %v238 = vmul.f32 %v182, 0.5
    %v239 = vmul.f32 %v185, 0.5
    %v240 = vmul.f32 %v190, 0.5
    %v241 = vmul.f32 %v193, 0.5
    %v242 = vmul.f32 %v198, 0.5
    %v243 = vmul.f32 %v201, 0.5
    %v244 = vmul.f32 %v206, 0.5
    %v245 = vmul.f32 %v209, 0.5
    %v246 = vmul.f32 %v214, 0.5
    %v247 = vmul.f32 %v217, 0.5
    %v248 = vmul.f32 %v222, 0.5
    %v249 = vmul.f32 %v225, 0.5
    %v250 = vmul.f32 %v230, 0.5
    %v251 = vmul.f32 %v233, 0.5
    %v252 = vmul.f32 %v174, 0.044715
    %v253 = vmul.f32 %v177, 0.044715
    %v254 = vmul.f32 %v182, 0.044715
    %v255 = vmul.f32 %v185, 0.044715
    %v256 = vmul.f32 %v190, 0.044715
    %v257 = vmul.f32 %v193, 0.044715
    %v258 = vmul.f32 %v198, 0.044715
    %v259 = vmul.f32 %v201, 0.044715
    %v260 = vmul.f32 %v206, 0.044715
    %v261 = vmul.f32 %v209, 0.044715
    %v262 = vmul.f32 %v214, 0.044715
    %v263 = vmul.f32 %v217, 0.044715
    %v264 = vmul.f32 %v222, 0.044715
    %v265 = vmul.f32 %v225, 0.044715
    %v266 = vmul.f32 %v230, 0.044715
    %v267 = vmul.f32 %v233, 0.044715
    %v268 = vmul.f32 %v252, %v174
    %v269 = vmul.f32 %v253, %v177
    %v270 = vmul.f32 %v254, %v182
    %v271 = vmul.f32 %v255, %v185
    %v272 = vmul.f32 %v256, %v190
    %v273 = vmul.f32 %v257, %v193
    %v274 = vmul.f32 %v258, %v198
    %v275 = vmul.f32 %v259, %v201
    %v276 = vmul.f32 %v260, %v206
    %v277 = vmul.f32 %v261, %v209
    %v278 = vmul.f32 %v262, %v214
    %v279 = vmul.f32 %v263, %v217
    %v280 = vmul.f32 %v264, %v222
    %v281 = vmul.f32 %v265, %v225
    %v282 = vmul.f32 %v266, %v230
    %v283 = vmul.f32 %v267, %v233
    %v284 = vmul.f32 %v268, %v174
    %v285 = vmul.f32 %v269, %v177
    %v286 = vmul.f32 %v270, %v182
    %v287 = vmul.f32 %v271, %v185
    %v288 = vmul.f32 %v272, %v190
    %v289 = vmul.f32 %v273, %v193
    %v290 = vmul.f32 %v274, %v198
    %v291 = vmul.f32 %v275, %v201
    %v292 = vmul.f32 %v276, %v206
    %v293 = vmul.f32 %v277, %v209
    %v294 = vmul.f32 %v278, %v214
    %v295 = vmul.f32 %v279, %v217
    %v296 = vmul.f32 %v280, %v222
    %v297 = vmul.f32 %v281, %v225
    %v298 = vmul.f32 %v282, %v230
    %v299 = vmul.f32 %v283, %v233
    %v300 = vadd.f32 %v174, %v284
    %v301 = vadd.f32 %v177, %v285
    %v302 = vadd.f32 %v182, %v286
    %v303 = vadd.f32 %v185, %v287
    %v304 = vadd.f32 %v190, %v288
    %v305 = vadd.f32 %v193, %v289
    %v306 = vadd.f32 %v198, %v290
    %v307 = vadd.f32 %v201, %v291
    %v308 = vadd.f32 %v206, %v292
    %v309 = vadd.f32 %v209, %v293
    %v310 = vadd.f32 %v214, %v294
    %v311 = vadd.f32 %v217, %v295
    %v312 = vadd.f32 %v222, %v296
    %v313 = vadd.f32 %v225, %v297
    %v314 = vadd.f32 %v230, %v298
    %v315 = vadd.f32 %v233, %v299
    %v316 = vmul.f32 %v300, 0.7978846
    %v317 = vmul.f32 %v301, 0.7978846
    %v318 = vmul.f32 %v302, 0.7978846
    %v319 = vmul.f32 %v303, 0.7978846
    %v320 = vmul.f32 %v304, 0.7978846
    %v321 = vmul.f32 %v305, 0.7978846
    %v322 = vmul.f32 %v306, 0.7978846
    %v323 = vmul.f32 %v307, 0.7978846
    %v324 = vmul.f32 %v308, 0.7978846
    %v325 = vmul.f32 %v309, 0.7978846
    %v326 = vmul.f32 %v310, 0.7978846
    %v327 = vmul.f32 %v311, 0.7978846
    %v328 = vmul.f32 %v312, 0.7978846
    %v329 = vmul.f32 %v313, 0.7978846
    %v330 = vmul.f32 %v314, 0.7978846
    %v331 = vmul.f32 %v315, 0.7978846
    %v332 = vtanh.pop %v316
    %v333 = vtanh.pop %v317
    %v334 = vtanh.pop %v318
    %v335 = vtanh.pop %v319
    %v336 = vtanh.pop %v320
    %v337 = vtanh.pop %v321
    %v338 = vtanh.pop %v322
    %v339 = vtanh.pop %v323
    %v340 = vtanh.pop %v324
    %v341 = vtanh.pop %v325
    %v342 = vtanh.pop %v326
    %v343 = vtanh.pop %v327
    %v344 = vtanh.pop %v328
    %v345 = vtanh.pop %v329
    %v346 = vtanh.pop %v330
    %v347 = vtanh.pop %v331
    %v348 = vadd.f32 %v332, 1.0
    %v349 = vadd.f32 %v333, 1.0
    %v350 = vadd.f32 %v334, 1.0
    %v351 = vadd.f32 %v335, 1.0
    %v352 = vadd.f32 %v336, 1.0
    %v353 = vadd.f32 %v337, 1.0
    %v354 = vadd.f32 %v338, 1.0
    %v355 = vadd.f32 %v339, 1.0
    %v356 = vadd.f32 %v340, 1.0
    %v357 = vadd.f32 %v341, 1.0
    %v358 = vadd.f32 %v342, 1.0
    %v359 = vadd.f32 %v343, 1.0
    %v360 = vadd.f32 %v344, 1.0
    %v361 = vadd.f32 %v345, 1.0
    %v362 = vadd.f32 %v346, 1.0
    %v363 = vadd.f32 %v347, 1.0
    %v364 = vmul.f32 %v236, %v348
    %v365 = vmul.f32 %v237, %v349
    %v366 = vmul.f32 %v238, %v350
    %v367 = vmul.f32 %v239, %v351
    %v368 = vmul.f32 %v240, %v352
    %v369 = vmul.f32 %v241, %v353
    %v370 = vmul.f32 %v242, %v354
    %v371 = vmul.f32 %v243, %v355
    %v372 = vmul.f32 %v244, %v356
    %v373 = vmul.f32 %v245, %v357
    %v374 = vmul.f32 %v246, %v358
    %v375 = vmul.f32 %v247, %v359
    %v376 = vmul.f32 %v248, %v360
    %v377 = vmul.f32 %v249, %v361
    %v378 = vmul.f32 %v250, %v362
    %v379 = vmul.f32 %v251, %v363
    %v380 = vpack.c.bf16 %v365, %v364
    %v381 = vpack.c.bf16 %v367, %v366
    %v382 = vpack.c.bf16 %v369, %v368
    %v383 = vpack.c.bf16 %v371, %v370
    %v384 = vpack.c.bf16 %v373, %v372
    %v385 = vpack.c.bf16 %v375, %v374
    %v386 = vpack.c.bf16 %v377, %v376
    %v387 = vpack.c.bf16 %v379, %v378
    %v388 = vld [vmem:[#allocation2] sm:$0xf]
    %v389 = vld [vmem:[#allocation2 + $0x4] sm:$0xf]
    %v390 = vld [vmem:[#allocation2 + $0x8] sm:$0xf]
    %v391 = vld [vmem:[#allocation2 + $0xc] sm:$0xf]
    %v392 = vld [vmem:[#allocation2 + $0x10] sm:$0xf]
    %v393 = vld [vmem:[#allocation2 + $0x14] sm:$0xf]
    %v394 = vld [vmem:[#allocation2 + $0x18] sm:$0xf]
    %v395 = vld [vmem:[#allocation2 + $0x1c] sm:$0xf]
    %v396 = vld [vmem:[#allocation2 + $0x20] sm:$0xf]
    %v397 = vld [vmem:[#allocation2 + $0x24] sm:$0xf]
    %v398 = vld [vmem:[#allocation2 + $0x28] sm:$0xf]
    %v399 = vld [vmem:[#allocation2 + $0x2c] sm:$0xf]
    %v400 = vld [vmem:[#allocation2 + $0x30] sm:$0xf]
    %v401 = vld [vmem:[#allocation2 + $0x34] sm:$0xf]
    %v402 = vld [vmem:[#allocation2 + $0x38] sm:$0xf]
    %v403 = vld [vmem:[#allocation2 + $0x3c] sm:$0xf]
    %v404 = vld [vmem:[%s5] sm:$0x1]
    %v406 = vlaneseq
    %v407 = vshrl.u32 %v406, 7
    %v408 = vsub.s32 0, %v407
    %v409 = vrot.slane %v404, %v408
    %v427 = vunpack.c.l.b16 %v388
    %v428 = vunpack.c.l.b16 %v389
    %v429 = vunpack.c.l.b16 %v390
    %v430 = vunpack.c.l.b16 %v391
    %v431 = vunpack.c.l.b16 %v392
    %v432 = vunpack.c.l.b16 %v393
    %v433 = vunpack.c.l.b16 %v394
    %v434 = vunpack.c.l.b16 %v395
    %v435 = vunpack.c.l.b16 %v396
    %v436 = vunpack.c.l.b16 %v397
    %v437 = vunpack.c.l.b16 %v398
    %v438 = vunpack.c.l.b16 %v399
    %v439 = vunpack.c.l.b16 %v400
    %v440 = vunpack.c.l.b16 %v401
    %v441 = vunpack.c.l.b16 %v402
    %v442 = vunpack.c.l.b16 %v403
    %v443 = vpack.c.b16 %v428, %v427
    %v444 = vpack.c.b16 %v430, %v429
    %v445 = vpack.c.b16 %v432, %v431
    %v446 = vpack.c.b16 %v434, %v433
    %v447 = vpack.c.b16 %v436, %v435
    %v448 = vpack.c.b16 %v438, %v437
    %v449 = vpack.c.b16 %v440, %v439
    %v450 = vpack.c.b16 %v442, %v441
    %459 = vmatprep.subr.bf16.mxu0 0
    %460 = vmatpush1.bf16.msra.mxu0 %v450
    %461 = vmatprep.subr.bf16.mxu0 0
    %462 = vmatpush1.bf16.msra.mxu0 %v449
    %463 = vmatprep.subr.bf16.mxu0 0
    %464 = vmatpush1.bf16.msra.mxu0 %v448
    %465 = vmatprep.subr.bf16.mxu0 0
    %466 = vmatpush1.bf16.msra.mxu0 %v447
    %467 = vmatprep.subr.bf16.mxu0 0
    %468 = vmatpush1.bf16.msra.mxu0 %v446
    %469 = vmatprep.subr.bf16.mxu0 0
    %470 = vmatpush1.bf16.msra.mxu0 %v445
    %471 = vmatprep.subr.bf16.mxu0 0
    %472 = vmatpush1.bf16.msra.mxu0 %v444
    %473 = vmatprep.subr.bf16.mxu0 0
    %474 = vmatpush1.bf16.msra.mxu0 %v443
    %475 = vmatprep.subr.bf16.mxu0 0
    %476 = vmatpush2.bf16.msra.mxu0 0
    %477 = vmatprep.subr.bf16.mxu0 0
    %478 = vmatpush2.bf16.msra.mxu0 0
    %479 = vmatprep.subr.bf16.mxu0 0
    %480 = vmatpush2.bf16.msra.mxu0 0
    %481 = vmatprep.subr.bf16.mxu0 0
    %482 = vmatpush2.bf16.msra.mxu0 0
    %483 = vmatprep.subr.bf16.mxu0 0
    %484 = vmatpush2.bf16.msra.mxu0 0
    %485 = vmatprep.subr.bf16.mxu0 0
    %486 = vmatpush2.bf16.msra.mxu0 0
    %487 = vmatprep.subr.bf16.mxu0 0
    %488 = vmatpush2.bf16.msra.mxu0 0
    %489 = vmatprep.subr.bf16.mxu0 0
    %490 = vmatpush2.bf16.msra.mxu0 0
    %491 = vmatprep.mubr.bf16.mxu0 0
    %492 = vmatmul.mubr.bf16.gmra.mxu0 %v380
    %v493 = vpop.f32.mrf.mxu0
    %v494 = vadd.f32 %v409, %v493
    %v495 = vpop.f32.mrf.mxu0
    %v496 = vpop.f32.mrf.mxu0
    %v497 = vadd.f32 %v409, %v496
    %v498 = vpop.f32.mrf.mxu0
    %499 = vmatprep.mubr.bf16.mxu0 0
    %500 = vmatmul.mubr.bf16.gmra.mxu0 %v381
    %v501 = vpop.f32.mrf.mxu0
    %v502 = vadd.f32 %v409, %v501
    %v503 = vpop.f32.mrf.mxu0
    %v504 = vpop.f32.mrf.mxu0
    %v505 = vadd.f32 %v409, %v504
    %v506 = vpop.f32.mrf.mxu0
    %507 = vmatprep.mubr.bf16.mxu0 0
    %508 = vmatmul.mubr.bf16.gmra.mxu0 %v382
    %v509 = vpop.f32.mrf.mxu0
    %v510 = vadd.f32 %v409, %v509
    %v511 = vpop.f32.mrf.mxu0
    %v512 = vpop.f32.mrf.mxu0
    %v513 = vadd.f32 %v409, %v512
    %v514 = vpop.f32.mrf.mxu0
    %515 = vmatprep.mubr.bf16.mxu0 0
    %516 = vmatmul.mubr.bf16.gmra.mxu0 %v383
    %v517 = vpop.f32.mrf.mxu0
    %v518 = vadd.f32 %v409, %v517
    %v519 = vpop.f32.mrf.mxu0
    %v520 = vpop.f32.mrf.mxu0
    %v521 = vadd.f32 %v409, %v520
    %v522 = vpop.f32.mrf.mxu0
    %523 = vmatprep.mubr.bf16.mxu0 0
    %524 = vmatmul.mubr.bf16.gmra.mxu0 %v384
    %v525 = vpop.f32.mrf.mxu0
    %v526 = vadd.f32 %v409, %v525
    %v527 = vpop.f32.mrf.mxu0
    %v528 = vpop.f32.mrf.mxu0
    %v529 = vadd.f32 %v409, %v528
    %v530 = vpop.f32.mrf.mxu0
    %531 = vmatprep.mubr.bf16.mxu0 0
    %532 = vmatmul.mubr.bf16.gmra.mxu0 %v385
    %v533 = vpop.f32.mrf.mxu0
    %v534 = vadd.f32 %v409, %v533
    %v535 = vpop.f32.mrf.mxu0
    %v536 = vpop.f32.mrf.mxu0
    %v537 = vadd.f32 %v409, %v536
    %v538 = vpop.f32.mrf.mxu0
    %539 = vmatprep.mubr.bf16.mxu0 0
    %540 = vmatmul.mubr.bf16.gmra.mxu0 %v386
    %v541 = vpop.f32.mrf.mxu0
    %v542 = vadd.f32 %v409, %v541
    %v543 = vpop.f32.mrf.mxu0
    %v544 = vpop.f32.mrf.mxu0
    %v545 = vadd.f32 %v409, %v544
    %v546 = vpop.f32.mrf.mxu0
    %547 = vmatprep.mubr.bf16.mxu0 0
    %548 = vmatmul.mubr.bf16.gmra.mxu0 %v387
    %v549 = vpop.f32.mrf.mxu0
    %v550 = vadd.f32 %v409, %v549
    %v551 = vpop.f32.mrf.mxu0
    %v552 = vpop.f32.mrf.mxu0
    %v553 = vadd.f32 %v409, %v552
    %v554 = vpop.f32.mrf.mxu0
    %555 = vdwg.mxu0
    %v556 = vmul.f32 %v494, 0.5
    %v557 = vmul.f32 %v497, 0.5
    %v558 = vmul.f32 %v502, 0.5
    %v559 = vmul.f32 %v505, 0.5
    %v560 = vmul.f32 %v510, 0.5
    %v561 = vmul.f32 %v513, 0.5
    %v562 = vmul.f32 %v518, 0.5
    %v563 = vmul.f32 %v521, 0.5
    %v564 = vmul.f32 %v526, 0.5
    %v565 = vmul.f32 %v529, 0.5
    %v566 = vmul.f32 %v534, 0.5
    %v567 = vmul.f32 %v537, 0.5
    %v568 = vmul.f32 %v542, 0.5
    %v569 = vmul.f32 %v545, 0.5
    %v570 = vmul.f32 %v550, 0.5
    %v571 = vmul.f32 %v553, 0.5
    %v572 = vmul.f32 %v494, 0.044715
    %v573 = vmul.f32 %v497, 0.044715
    %v574 = vmul.f32 %v502, 0.044715
    %v575 = vmul.f32 %v505, 0.044715
    %v576 = vmul.f32 %v510, 0.044715
    %v577 = vmul.f32 %v513, 0.044715
    %v578 = vmul.f32 %v518, 0.044715
    %v579 = vmul.f32 %v521, 0.044715
    %v580 = vmul.f32 %v526, 0.044715
    %v581 = vmul.f32 %v529, 0.044715
    %v582 = vmul.f32 %v534, 0.044715
    %v583 = vmul.f32 %v537, 0.044715
    %v584 = vmul.f32 %v542, 0.044715
    %v585 = vmul.f32 %v545, 0.044715
    %v586 = vmul.f32 %v550, 0.044715
    %v587 = vmul.f32 %v553, 0.044715
    %v588 = vmul.f32 %v572, %v494
    %v589 = vmul.f32 %v573, %v497
    %v590 = vmul.f32 %v574, %v502
    %v591 = vmul.f32 %v575, %v505
    %v592 = vmul.f32 %v576, %v510
    %v593 = vmul.f32 %v577, %v513
    %v594 = vmul.f32 %v578, %v518
    %v595 = vmul.f32 %v579, %v521
    %v596 = vmul.f32 %v580, %v526
    %v597 = vmul.f32 %v581, %v529
    %v598 = vmul.f32 %v582, %v534
    %v599 = vmul.f32 %v583, %v537
    %v600 = vmul.f32 %v584, %v542
    %v601 = vmul.f32 %v585, %v545
    %v602 = vmul.f32 %v586, %v550
    %v603 = vmul.f32 %v587, %v553
    %v604 = vmul.f32 %v588, %v494
    %v605 = vmul.f32 %v589, %v497
    %v606 = vmul.f32 %v590, %v502
    %v607 = vmul.f32 %v591, %v505
    %v608 = vmul.f32 %v592, %v510
    %v609 = vmul.f32 %v593, %v513
    %v610 = vmul.f32 %v594, %v518
    %v611 = vmul.f32 %v595, %v521
    %v612 = vmul.f32 %v596, %v526
    %v613 = vmul.f32 %v597, %v529
    %v614 = vmul.f32 %v598, %v534
    %v615 = vmul.f32 %v599, %v537
    %v616 = vmul.f32 %v600, %v542
    %v617 = vmul.f32 %v601, %v545
    %v618 = vmul.f32 %v602, %v550
    %v619 = vmul.f32 %v603, %v553
    %v620 = vadd.f32 %v494, %v604
    %v621 = vadd.f32 %v497, %v605
    %v622 = vadd.f32 %v502, %v606
    %v623 = vadd.f32 %v505, %v607
    %v624 = vadd.f32 %v510, %v608
    %v625 = vadd.f32 %v513, %v609
    %v626 = vadd.f32 %v518, %v610
    %v627 = vadd.f32 %v521, %v611
    %v628 = vadd.f32 %v526, %v612
    %v629 = vadd.f32 %v529, %v613
    %v630 = vadd.f32 %v534, %v614
    %v631 = vadd.f32 %v537, %v615
    %v632 = vadd.f32 %v542, %v616
    %v633 = vadd.f32 %v545, %v617
    %v634 = vadd.f32 %v550, %v618
    %v635 = vadd.f32 %v553, %v619
    %v636 = vmul.f32 %v620, 0.7978846
    %v637 = vmul.f32 %v621, 0.7978846
    %v638 = vmul.f32 %v622, 0.7978846
    %v639 = vmul.f32 %v623, 0.7978846
    %v640 = vmul.f32 %v624, 0.7978846
    %v641 = vmul.f32 %v625, 0.7978846
    %v642 = vmul.f32 %v626, 0.7978846
    %v643 = vmul.f32 %v627, 0.7978846
    %v644 = vmul.f32 %v628, 0.7978846
    %v645 = vmul.f32 %v629, 0.7978846
    %v646 = vmul.f32 %v630, 0.7978846
    %v647 = vmul.f32 %v631, 0.7978846
    %v648 = vmul.f32 %v632, 0.7978846
    %v649 = vmul.f32 %v633, 0.7978846
    %v650 = vmul.f32 %v634, 0.7978846
    %v651 = vmul.f32 %v635, 0.7978846
    %v652 = vtanh.pop %v636
    %v653 = vtanh.pop %v637
    %v654 = vtanh.pop %v638
    %v655 = vtanh.pop %v639
    %v656 = vtanh.pop %v640
    %v657 = vtanh.pop %v641
    %v658 = vtanh.pop %v642
    %v659 = vtanh.pop %v643
    %v660 = vtanh.pop %v644
    %v661 = vtanh.pop %v645
    %v662 = vtanh.pop %v646
    %v663 = vtanh.pop %v647
    %v664 = vtanh.pop %v648
    %v665 = vtanh.pop %v649
    %v666 = vtanh.pop %v650
    %v667 = vtanh.pop %v651
    %v668 = vadd.f32 %v652, 1.0
    %v669 = vadd.f32 %v653, 1.0
    %v670 = vadd.f32 %v654, 1.0
    %v671 = vadd.f32 %v655, 1.0
    %v672 = vadd.f32 %v656, 1.0
    %v673 = vadd.f32 %v657, 1.0
    %v674 = vadd.f32 %v658, 1.0
    %v675 = vadd.f32 %v659, 1.0
    %v676 = vadd.f32 %v660, 1.0
    %v677 = vadd.f32 %v661, 1.0
    %v678 = vadd.f32 %v662, 1.0
    %v679 = vadd.f32 %v663, 1.0
    %v680 = vadd.f32 %v664, 1.0
    %v681 = vadd.f32 %v665, 1.0
    %v682 = vadd.f32 %v666, 1.0
    %v683 = vadd.f32 %v667, 1.0
    %v684 = vmul.f32 %v556, %v668
    %v685 = vmul.f32 %v557, %v669
    %v686 = vmul.f32 %v558, %v670
    %v687 = vmul.f32 %v559, %v671
    %v688 = vmul.f32 %v560, %v672
    %v689 = vmul.f32 %v561, %v673
    %v690 = vmul.f32 %v562, %v674
    %v691 = vmul.f32 %v563, %v675
    %v692 = vmul.f32 %v564, %v676
    %v693 = vmul.f32 %v565, %v677
    %v694 = vmul.f32 %v566, %v678
    %v695 = vmul.f32 %v567, %v679
    %v696 = vmul.f32 %v568, %v680
    %v697 = vmul.f32 %v569, %v681
    %v698 = vmul.f32 %v570, %v682
    %v699 = vmul.f32 %v571, %v683
    %v700 = vpack.c.bf16 %v685, %v684
    %v701 = vpack.c.bf16 %v687, %v686
    %v702 = vpack.c.bf16 %v689, %v688
    %v703 = vpack.c.bf16 %v691, %v690
    %v704 = vpack.c.bf16 %v693, %v692
    %v705 = vpack.c.bf16 %v695, %v694
    %v706 = vpack.c.bf16 %v697, %v696
    %v707 = vpack.c.bf16 %v699, %v698
    %v708 = vld [vmem:[#allocation5] sm:$0xf]
    %v709 = vld [vmem:[#allocation5 + $0x4] sm:$0xf]
    %v710 = vld [vmem:[#allocation5 + $0x8] sm:$0xf]
    %v711 = vld [vmem:[#allocation5 + $0xc] sm:$0xf]
    %v712 = vld [vmem:[#allocation5 + $0x10] sm:$0xf]
    %v713 = vld [vmem:[#allocation5 + $0x14] sm:$0xf]
    %v714 = vld [vmem:[#allocation5 + $0x18] sm:$0xf]
    %v715 = vld [vmem:[#allocation5 + $0x1c] sm:$0xf]
    %v716 = vld [vmem:[#allocation5 + $0x20] sm:$0xf]
    %v717 = vld [vmem:[#allocation5 + $0x24] sm:$0xf]
    %v718 = vld [vmem:[#allocation5 + $0x28] sm:$0xf]
    %v719 = vld [vmem:[#allocation5 + $0x2c] sm:$0xf]
    %v720 = vld [vmem:[#allocation5 + $0x30] sm:$0xf]
    %v721 = vld [vmem:[#allocation5 + $0x34] sm:$0xf]
    %v722 = vld [vmem:[#allocation5 + $0x38] sm:$0xf]
    %v723 = vld [vmem:[#allocation5 + $0x3c] sm:$0xf]
    %v724 = vld [vmem:[%s7] sm:$0x1]
    %v726 = vlaneseq
    %v727 = vshrl.u32 %v726, 7
    %v728 = vsub.s32 0, %v727
    %v729 = vrot.slane %v724, %v728
    %v747 = vunpack.c.l.b16 %v708
    %v748 = vunpack.c.l.b16 %v709
    %v749 = vunpack.c.l.b16 %v710
    %v750 = vunpack.c.l.b16 %v711
    %v751 = vunpack.c.l.b16 %v712
    %v752 = vunpack.c.l.b16 %v713
    %v753 = vunpack.c.l.b16 %v714
    %v754 = vunpack.c.l.b16 %v715
    %v755 = vunpack.c.l.b16 %v716
    %v756 = vunpack.c.l.b16 %v717
    %v757 = vunpack.c.l.b16 %v718
    %v758 = vunpack.c.l.b16 %v719
    %v759 = vunpack.c.l.b16 %v720
    %v760 = vunpack.c.l.b16 %v721
    %v761 = vunpack.c.l.b16 %v722
    %v762 = vunpack.c.l.b16 %v723
    %v763 = vpack.c.b16 %v748, %v747
    %v764 = vpack.c.b16 %v750, %v749
    %v765 = vpack.c.b16 %v752, %v751
    %v766 = vpack.c.b16 %v754, %v753
    %v767 = vpack.c.b16 %v756, %v755
    %v768 = vpack.c.b16 %v758, %v757
    %v769 = vpack.c.b16 %v760, %v759
    %v770 = vpack.c.b16 %v762, %v761
    %779 = vmatprep.subr.bf16.mxu0 0
    %780 = vmatpush1.bf16.msra.mxu0 %v770
    %781 = vmatprep.subr.bf16.mxu0 0
    %782 = vmatpush1.bf16.msra.mxu0 %v769
    %783 = vmatprep.subr.bf16.mxu0 0
    %784 = vmatpush1.bf16.msra.mxu0 %v768
    %785 = vmatprep.subr.bf16.mxu0 0
    %786 = vmatpush1.bf16.msra.mxu0 %v767
    %787 = vmatprep.subr.bf16.mxu0 0
    %788 = vmatpush1.bf16.msra.mxu0 %v766
    %789 = vmatprep.subr.bf16.mxu0 0
    %790 = vmatpush1.bf16.msra.mxu0 %v765
    %791 = vmatprep.subr.bf16.mxu0 0
    %792 = vmatpush1.bf16.msra.mxu0 %v764
    %793 = vmatprep.subr.bf16.mxu0 0
    %794 = vmatpush1.bf16.msra.mxu0 %v763
    %795 = vmatprep.subr.bf16.mxu0 0
    %796 = vmatpush2.bf16.msra.mxu0 0
    %797 = vmatprep.subr.bf16.mxu0 0
    %798 = vmatpush2.bf16.msra.mxu0 0
    %799 = vmatprep.subr.bf16.mxu0 0
    %800 = vmatpush2.bf16.msra.mxu0 0
    %801 = vmatprep.subr.bf16.mxu0 0
    %802 = vmatpush2.bf16.msra.mxu0 0
    %803 = vmatprep.subr.bf16.mxu0 0
    %804 = vmatpush2.bf16.msra.mxu0 0
    %805 = vmatprep.subr.bf16.mxu0 0
    %806 = vmatpush2.bf16.msra.mxu0 0
    %807 = vmatprep.subr.bf16.mxu0 0
    %808 = vmatpush2.bf16.msra.mxu0 0
    %809 = vmatprep.subr.bf16.mxu0 0
    %810 = vmatpush2.bf16.msra.mxu0 0
    %811 = vmatprep.mubr.bf16.mxu0 0
    %812 = vmatmul.mubr.bf16.gmra.mxu0 %v700
    %v813 = vpop.f32.mrf.mxu0
    %v814 = vadd.f32 %v729, %v813
    %v815 = vpop.f32.mrf.mxu0
    %v816 = vpop.f32.mrf.mxu0
    %v817 = vadd.f32 %v729, %v816
    %v818 = vpop.f32.mrf.mxu0
    %819 = vmatprep.mubr.bf16.mxu0 0
    %820 = vmatmul.mubr.bf16.gmra.mxu0 %v701
    %v821 = vpop.f32.mrf.mxu0
    %v822 = vadd.f32 %v729, %v821
    %v823 = vpop.f32.mrf.mxu0
    %v824 = vpop.f32.mrf.mxu0
    %v825 = vadd.f32 %v729, %v824
    %v826 = vpop.f32.mrf.mxu0
    %827 = vmatprep.mubr.bf16.mxu0 0
    %828 = vmatmul.mubr.bf16.gmra.mxu0 %v702
    %v829 = vpop.f32.mrf.mxu0
    %v830 = vadd.f32 %v729, %v829
    %v831 = vpop.f32.mrf.mxu0
    %v832 = vpop.f32.mrf.mxu0
    %v833 = vadd.f32 %v729, %v832
    %v834 = vpop.f32.mrf.mxu0
    %835 = vmatprep.mubr.bf16.mxu0 0
    %836 = vmatmul.mubr.bf16.gmra.mxu0 %v703
    %v837 = vpop.f32.mrf.mxu0
    %v838 = vadd.f32 %v729, %v837
    %v839 = vpop.f32.mrf.mxu0
    %v840 = vpop.f32.mrf.mxu0
    %v841 = vadd.f32 %v729, %v840
    %v842 = vpop.f32.mrf.mxu0
    %843 = vmatprep.mubr.bf16.mxu0 0
    %844 = vmatmul.mubr.bf16.gmra.mxu0 %v704
    %v845 = vpop.f32.mrf.mxu0
    %v846 = vadd.f32 %v729, %v845
    %v847 = vpop.f32.mrf.mxu0
    %v848 = vpop.f32.mrf.mxu0
    %v849 = vadd.f32 %v729, %v848
    %v850 = vpop.f32.mrf.mxu0
    %851 = vmatprep.mubr.bf16.mxu0 0
    %852 = vmatmul.mubr.bf16.gmra.mxu0 %v705
    %v853 = vpop.f32.mrf.mxu0
    %v854 = vadd.f32 %v729, %v853
    %v855 = vpop.f32.mrf.mxu0
    %v856 = vpop.f32.mrf.mxu0
    %v857 = vadd.f32 %v729, %v856
    %v858 = vpop.f32.mrf.mxu0
    %859 = vmatprep.mubr.bf16.mxu0 0
    %860 = vmatmul.mubr.bf16.gmra.mxu0 %v706
    %v861 = vpop.f32.mrf.mxu0
    %v862 = vadd.f32 %v729, %v861
    %v863 = vpop.f32.mrf.mxu0
    %v864 = vpop.f32.mrf.mxu0
    %v865 = vadd.f32 %v729, %v864
    %v866 = vpop.f32.mrf.mxu0
    %867 = vmatprep.mubr.bf16.mxu0 0
    %868 = vmatmul.mubr.bf16.gmra.mxu0 %v707
    %v869 = vpop.f32.mrf.mxu0
    %v870 = vadd.f32 %v729, %v869
    %v871 = vpop.f32.mrf.mxu0
    %v872 = vpop.f32.mrf.mxu0
    %v873 = vadd.f32 %v729, %v872
    %v874 = vpop.f32.mrf.mxu0
    %875 = vdwg.mxu0
    %v876 = vld [vmem:[%s1] sm:$0xff]
    %v877 = vld [vmem:[%s1 + $0x8] sm:$0xff]
    %v878 = vld [vmem:[%s1 + $0x10] sm:$0xff]
    %v879 = vld [vmem:[%s1 + $0x18] sm:$0xff]
    %v880 = vld [vmem:[%s1 + $0x20] sm:$0xff]
    %v881 = vld [vmem:[%s1 + $0x28] sm:$0xff]
    %v882 = vld [vmem:[%s1 + $0x30] sm:$0xff]
    %v883 = vld [vmem:[%s1 + $0x38] sm:$0xff]
    %v884 = vld [vmem:[%s1 + $0x40] sm:$0xff]
    %v885 = vld [vmem:[%s1 + $0x48] sm:$0xff]
    %v886 = vld [vmem:[%s1 + $0x50] sm:$0xff]
    %v887 = vld [vmem:[%s1 + $0x58] sm:$0xff]
    %v888 = vld [vmem:[%s1 + $0x60] sm:$0xff]
    %v889 = vld [vmem:[%s1 + $0x68] sm:$0xff]
    %v890 = vld [vmem:[%s1 + $0x70] sm:$0xff]
    %v891 = vld [vmem:[%s1 + $0x78] sm:$0xff]
    %v892 = vadd.f32 %v814, %v876
    %v893 = vadd.f32 %v817, %v877
    %v894 = vadd.f32 %v822, %v878
    %v895 = vadd.f32 %v825, %v879
    %v896 = vadd.f32 %v830, %v880
    %v897 = vadd.f32 %v833, %v881
    %v898 = vadd.f32 %v838, %v882
    %v899 = vadd.f32 %v841, %v883
    %v900 = vadd.f32 %v846, %v884
    %v901 = vadd.f32 %v849, %v885
    %v902 = vadd.f32 %v854, %v886
    %v903 = vadd.f32 %v857, %v887
    %v904 = vadd.f32 %v862, %v888
    %v905 = vadd.f32 %v865, %v889
    %v906 = vadd.f32 %v870, %v890
    %v907 = vadd.f32 %v873, %v891
    %v908 = vpack.c.bf16 %v893, %v892
    %v909 = vpack.c.bf16 %v895, %v894
    %v910 = vpack.c.bf16 %v897, %v896
    %v911 = vpack.c.bf16 %v899, %v898
    %v912 = vpack.c.bf16 %v901, %v900
    %v913 = vpack.c.bf16 %v903, %v902
    %v914 = vpack.c.bf16 %v905, %v904
    %v915 = vpack.c.bf16 %v907, %v906
    %v916 = vld [vmem:[#allocation7] sm:$0xf]
    %v917 = vld [vmem:[#allocation7 + $0x4] sm:$0xf]
    %v918 = vld [vmem:[#allocation7 + $0x8] sm:$0xf]
    %v919 = vld [vmem:[#allocation7 + $0xc] sm:$0xf]
    %v920 = vld [vmem:[#allocation7 + $0x10] sm:$0xf]
    %v921 = vld [vmem:[#allocation7 + $0x14] sm:$0xf]
    %v922 = vld [vmem:[#allocation7 + $0x18] sm:$0xf]
    %v923 = vld [vmem:[#allocation7 + $0x1c] sm:$0xf]
    %v924 = vld [vmem:[#allocation7 + $0x20] sm:$0xf]
    %v925 = vld [vmem:[#allocation7 + $0x24] sm:$0xf]
    %v926 = vld [vmem:[#allocation7 + $0x28] sm:$0xf]
    %v927 = vld [vmem:[#allocation7 + $0x2c] sm:$0xf]
    %v928 = vld [vmem:[#allocation7 + $0x30] sm:$0xf]
    %v929 = vld [vmem:[#allocation7 + $0x34] sm:$0xf]
    %v930 = vld [vmem:[#allocation7 + $0x38] sm:$0xf]
    %v931 = vld [vmem:[#allocation7 + $0x3c] sm:$0xf]
    %v932 = vld [vmem:[%s9] sm:$0x1]
    %v934 = vlaneseq
    %v935 = vshrl.u32 %v934, 7
    %v936 = vsub.s32 0, %v935
    %v937 = vrot.slane %v932, %v936
    %v955 = vunpack.c.l.b16 %v916
    %v956 = vunpack.c.l.b16 %v917
    %v957 = vunpack.c.l.b16 %v918
    %v958 = vunpack.c.l.b16 %v919
    %v959 = vunpack.c.l.b16 %v920
    %v960 = vunpack.c.l.b16 %v921
    %v961 = vunpack.c.l.b16 %v922
    %v962 = vunpack.c.l.b16 %v923
    %v963 = vunpack.c.l.b16 %v924
    %v964 = vunpack.c.l.b16 %v925
    %v965 = vunpack.c.l.b16 %v926
    %v966 = vunpack.c.l.b16 %v927
    %v967 = vunpack.c.l.b16 %v928
    %v968 = vunpack.c.l.b16 %v929
    %v969 = vunpack.c.l.b16 %v930
    %v970 = vunpack.c.l.b16 %v931
    %v971 = vpack.c.b16 %v956, %v955
    %v972 = vpack.c.b16 %v958, %v957
    %v973 = vpack.c.b16 %v960, %v959
    %v974 = vpack.c.b16 %v962, %v961
    %v975 = vpack.c.b16 %v964, %v963
    %v976 = vpack.c.b16 %v966, %v965
    %v977 = vpack.c.b16 %v968, %v967
    %v978 = vpack.c.b16 %v970, %v969
    %987 = vmatprep.subr.bf16.mxu0 0
    %988 = vmatpush1.bf16.msra.mxu0 %v978
    %989 = vmatprep.subr.bf16.mxu0 0
    %990 = vmatpush1.bf16.msra.mxu0 %v977
    %991 = vmatprep.subr.bf16.mxu0 0
    %992 = vmatpush1.bf16.msra.mxu0 %v976
    %993 = vmatprep.subr.bf16.mxu0 0
    %994 = vmatpush1.bf16.msra.mxu0 %v975
    %995 = vmatprep.subr.bf16.mxu0 0
    %996 = vmatpush1.bf16.msra.mxu0 %v974
    %997 = vmatprep.subr.bf16.mxu0 0
    %998 = vmatpush1.bf16.msra.mxu0 %v973
    %999 = vmatprep.subr.bf16.mxu0 0
    %1000 = vmatpush1.bf16.msra.mxu0 %v972
    %1001 = vmatprep.subr.bf16.mxu0 0
    %1002 = vmatpush1.bf16.msra.mxu0 %v971
    %1003 = vmatprep.subr.bf16.mxu0 0
    %1004 = vmatpush2.bf16.msra.mxu0 0
    %1005 = vmatprep.subr.bf16.mxu0 0
    %1006 = vmatpush2.bf16.msra.mxu0 0
    %1007 = vmatprep.subr.bf16.mxu0 0
    %1008 = vmatpush2.bf16.msra.mxu0 0
    %1009 = vmatprep.subr.bf16.mxu0 0
    %1010 = vmatpush2.bf16.msra.mxu0 0
    %1011 = vmatprep.subr.bf16.mxu0 0
    %1012 = vmatpush2.bf16.msra.mxu0 0
    %1013 = vmatprep.subr.bf16.mxu0 0
    %1014 = vmatpush2.bf16.msra.mxu0 0
    %1015 = vmatprep.subr.bf16.mxu0 0
    %1016 = vmatpush2.bf16.msra.mxu0 0
    %1017 = vmatprep.subr.bf16.mxu0 0
    %1018 = vmatpush2.bf16.msra.mxu0 0
    %1019 = vmatprep.mubr.bf16.mxu0 0
    %1020 = vmatmul.mubr.bf16.gmra.mxu0 %v908
    %v1021 = vpop.f32.mrf.mxu0
    %v1022 = vadd.f32 %v937, %v1021
    %v1023 = vpop.f32.mrf.mxu0
    %v1024 = vpop.f32.mrf.mxu0
    %v1025 = vadd.f32 %v937, %v1024
    %v1026 = vpop.f32.mrf.mxu0
    %1027 = vmatprep.mubr.bf16.mxu0 0
    %1028 = vmatmul.mubr.bf16.gmra.mxu0 %v909
    %v1029 = vpop.f32.mrf.mxu0
    %v1030 = vadd.f32 %v937, %v1029
    %v1031 = vpop.f32.mrf.mxu0
    %v1032 = vpop.f32.mrf.mxu0
    %v1033 = vadd.f32 %v937, %v1032
    %v1034 = vpop.f32.mrf.mxu0
    %1035 = vmatprep.mubr.bf16.mxu0 0
    %1036 = vmatmul.mubr.bf16.gmra.mxu0 %v910
    %v1037 = vpop.f32.mrf.mxu0
    %v1038 = vadd.f32 %v937, %v1037
    %v1039 = vpop.f32.mrf.mxu0
    %v1040 = vpop.f32.mrf.mxu0
    %v1041 = vadd.f32 %v937, %v1040
    %v1042 = vpop.f32.mrf.mxu0
    %1043 = vmatprep.mubr.bf16.mxu0 0
    %1044 = vmatmul.mubr.bf16.gmra.mxu0 %v911
    %v1045 = vpop.f32.mrf.mxu0
    %v1046 = vadd.f32 %v937, %v1045
    %v1047 = vpop.f32.mrf.mxu0
    %v1048 = vpop.f32.mrf.mxu0
    %v1049 = vadd.f32 %v937, %v1048
    %v1050 = vpop.f32.mrf.mxu0
    %1051 = vmatprep.mubr.bf16.mxu0 0
    %1052 = vmatmul.mubr.bf16.gmra.mxu0 %v912
    %v1053 = vpop.f32.mrf.mxu0
    %v1054 = vadd.f32 %v937, %v1053
    %v1055 = vpop.f32.mrf.mxu0
    %v1056 = vpop.f32.mrf.mxu0
    %v1057 = vadd.f32 %v937, %v1056
    %v1058 = vpop.f32.mrf.mxu0
    %1059 = vmatprep.mubr.bf16.mxu0 0
    %1060 = vmatmul.mubr.bf16.gmra.mxu0 %v913
    %v1061 = vpop.f32.mrf.mxu0
    %v1062 = vadd.f32 %v937, %v1061
    %v1063 = vpop.f32.mrf.mxu0
    %v1064 = vpop.f32.mrf.mxu0
    %v1065 = vadd.f32 %v937, %v1064
    %v1066 = vpop.f32.mrf.mxu0
    %1067 = vmatprep.mubr.bf16.mxu0 0
    %1068 = vmatmul.mubr.bf16.gmra.mxu0 %v914
    %v1069 = vpop.f32.mrf.mxu0
    %v1070 = vadd.f32 %v937, %v1069
    %v1071 = vpop.f32.mrf.mxu0
    %v1072 = vpop.f32.mrf.mxu0
    %v1073 = vadd.f32 %v937, %v1072
    %v1074 = vpop.f32.mrf.mxu0
    %1075 = vmatprep.mubr.bf16.mxu0 0
    %1076 = vmatmul.mubr.bf16.gmra.mxu0 %v915
    %v1077 = vpop.f32.mrf.mxu0
    %v1078 = vadd.f32 %v937, %v1077
    %v1079 = vpop.f32.mrf.mxu0
    %v1080 = vpop.f32.mrf.mxu0
    %v1081 = vadd.f32 %v937, %v1080
    %v1082 = vpop.f32.mrf.mxu0
    %1083 = vdwg.mxu0
    %v1084 = vpack.c.bf16 %v1025, %v1022
    %v1085 = vpack.c.bf16 %v1033, %v1030
    %v1086 = vpack.c.bf16 %v1041, %v1038
    %v1087 = vpack.c.bf16 %v1049, %v1046
    %v1088 = vpack.c.bf16 %v1057, %v1054
    %v1089 = vpack.c.bf16 %v1065, %v1062
    %v1090 = vpack.c.bf16 %v1073, %v1070
    %v1091 = vpack.c.bf16 %v1081, %v1078
    %v1100 = vunpack.c.l.b16 %v1084
    %v1101 = vunpack.c.h.b16 %v1084
    %v1102 = vunpack.c.l.b16 %v1085
    %v1103 = vunpack.c.h.b16 %v1085
    %v1104 = vunpack.c.l.b16 %v1086
    %v1105 = vunpack.c.h.b16 %v1086
    %v1106 = vunpack.c.l.b16 %v1087
    %v1107 = vunpack.c.h.b16 %v1087
    %v1108 = vunpack.c.l.b16 %v1088
    %v1109 = vunpack.c.h.b16 %v1088
    %v1110 = vunpack.c.l.b16 %v1089
    %v1111 = vunpack.c.h.b16 %v1089
    %v1112 = vunpack.c.l.b16 %v1090
    %v1113 = vunpack.c.h.b16 %v1090
    %v1114 = vunpack.c.l.b16 %v1091
    %v1115 = vunpack.c.h.b16 %v1091
    %v1116 = vpack.c.b16 %v1100, %v1100
    %v1117 = vpack.c.b16 %v1101, %v1101
    %v1118 = vpack.c.b16 %v1102, %v1102
    %v1119 = vpack.c.b16 %v1103, %v1103
    %v1120 = vpack.c.b16 %v1104, %v1104
    %v1121 = vpack.c.b16 %v1105, %v1105
    %v1122 = vpack.c.b16 %v1106, %v1106
    %v1123 = vpack.c.b16 %v1107, %v1107
    %v1124 = vpack.c.b16 %v1108, %v1108
    %v1125 = vpack.c.b16 %v1109, %v1109
    %v1126 = vpack.c.b16 %v1110, %v1110
    %v1127 = vpack.c.b16 %v1111, %v1111
    %v1128 = vpack.c.b16 %v1112, %v1112
    %v1129 = vpack.c.b16 %v1113, %v1113
    %v1130 = vpack.c.b16 %v1114, %v1114
    %v1131 = vpack.c.b16 %v1115, %v1115
    %1148 = vst [vmem:[#allocation8] sm:$0xf] %v1116
    %1149 = vst [vmem:[#allocation8 + $0x4] sm:$0xf] %v1117
    %1150 = vst [vmem:[#allocation8 + $0x8] sm:$0xf] %v1118
    %1151 = vst [vmem:[#allocation8 + $0xc] sm:$0xf] %v1119
    %1152 = vst [vmem:[#allocation8 + $0x10] sm:$0xf] %v1120
    %1153 = vst [vmem:[#allocation8 + $0x14] sm:$0xf] %v1121
    %1154 = vst [vmem:[#allocation8 + $0x18] sm:$0xf] %v1122
    %1155 = vst [vmem:[#allocation8 + $0x1c] sm:$0xf] %v1123
    %1156 = vst [vmem:[#allocation8 + $0x20] sm:$0xf] %v1124
    %1157 = vst [vmem:[#allocation8 + $0x24] sm:$0xf] %v1125
    %1158 = vst [vmem:[#allocation8 + $0x28] sm:$0xf] %v1126
    %1159 = vst [vmem:[#allocation8 + $0x2c] sm:$0xf] %v1127
    %1160 = vst [vmem:[#allocation8 + $0x30] sm:$0xf] %v1128
    %1161 = vst [vmem:[#allocation8 + $0x34] sm:$0xf] %v1129
    %1162 = vst [vmem:[#allocation8 + $0x38] sm:$0xf] %v1130
    %1163 = vst [vmem:[#allocation8 + $0x3c] sm:$0xf] %v1131
    // Predicated region
    $region54: #{tpu_custom_call.1} parent=1 // pred_check
      _
    $region55: #{tpu_custom_call.1} parent=1 // pred_check_branch
      %1165 = sbr.rel (0) target = $region57
    $region56: #{tpu_custom_call.1} parent=1 // pred_region
      %s1167 = ssub.s32 1024, 1024
      %1168 = vsyncadd [#allocation4], %s1167
      %s1169 = sshll.u32 [#allocation8], 4
      %s1170 = int_to_ptr.vmem [resolvable:$true] %s1169
      %1175 = dma.vmem_to_hbm [thread:$0]  %s1170, 1024, %s10, [#allocation4], 64, 64, 4
    $region57: #{tpu_custom_call.1} parent=1 // pred_fallthru
      _
    // Predicated region
    $region58: #{tpu_custom_call.1} parent=1 // pred_check
      _
    $region59: #{tpu_custom_call.1} parent=1 // pred_check_branch
      %1177 = sbr.rel (0) target = $region61
    $region60: #{tpu_custom_call.1} parent=1 // pred_region
      %1178 = dma.done [#allocation4], 1024
    $region61: #{tpu_custom_call.1} parent=1 // pred_fallthru
      _
    %1179 = vsyncpa [#allocation3], 1
    %1180 = vsyncpa [#allocation6], 1
    %1181 = vsyncpa [#allocation4], 1

</llo_original>
